<compile_context>
chip_gen: v5e
topology: v5e:2x2
jax: 0.10.0
libtpu: 0.0.40
codegen_flags: <defaults>
</compile_context>

<pallas_src>
import numpy as np
import jax
import jax.numpy as jnp
from jax.experimental import pallas as pl
from jax.experimental.pallas import tpu as pltpu

# ---------------- configuration (small, module-consistent shapes) -----------
LORA_R = 32
HIDDEN = 128      # config.hidden_size
FFN = 256         # config.intermediate_size
NUM_EXPERTS = 4   # config.num_local_experts
TOP_K = 2         # config.num_experts_per_tok
BATCH = 2
SEQ = 8


# ---------------------------- fused Pallas kernel ----------------------------
def moe_fused_kernel(x_ref, gate_ref, w13_ref, w2_ref,
                     a13_ref, b13_ref, a2cat_ref, b2cat_ref,
                     out_ref, logits_ref):
    num_experts = logits_ref.shape[-1]
    ffn = w2_ref.shape[0]
    lora_r = a13_ref.shape[-1] // 2          # a13 stacks gate|up factors -> 2R
    tokens = x_ref.shape[0]

    x = x_ref[...]                                               # [T, H] f32

    # ------------------------- router (kept in f32) -------------------------
    logits = jnp.dot(x, gate_ref[...], preferred_element_type=jnp.float32)
    logits_ref[...] = logits                                     # [T, E]

    # --------- vectorized top-2 + renormalisation (TOP_K == 2) --------------
    # The softmax normalizer cancels in the top-2 renormalized weights, so work
    # with q = exp(logits - max); the top-1 value of q is exactly 1.0.
    lane_e = jax.lax.broadcasted_iota(jnp.int32, logits.shape, 1).astype(jnp.float32)
    mx = jnp.max(logits, axis=-1, keepdims=True)                 # [T, 1]
    # lowest-index argmax -> torch.topk-compatible tie-break
    idx1 = jnp.min(jnp.where(logits == mx, lane_e, float(num_experts)),
                   axis=-1, keepdims=True)                       # [T, 1]
    q = jnp.exp(logits - mx)                                     # [T, E]
    q_rest = jnp.where(lane_e == idx1, -1.0, q)                  # mask the argmax lane
    m2 = jnp.max(q_rest, axis=-1, keepdims=True)                 # second-largest value
    idx2 = jnp.min(jnp.where(q_rest == m2, lane_e, float(num_experts)),
                   axis=-1, keepdims=True)                       # [T, 1]
    inv_denom = pl.reciprocal(1.0 + m2, approx=True)             # 1/(q1+q2), q1 == 1

    # ----------------- experts: mean + LoRA MLP, bf16 -> f32 ----------------
    x_bf = x.astype(jnp.bfloat16)
    w13 = w13_ref[...]                                           # [H, 2F]  bf16
    w2t = w2_ref[...]                                            # [F, H]   bf16
    a2cat = a2cat_ref[...]                                       # [F, E*R] bf16
    b2cat = b2cat_ref[...]                                       # [E*R, H] bf16

    # Expert-independent mean-weight gate/up projection (hoisted out of loop).
    x13_base = jnp.dot(x_bf, w13, preferred_element_type=jnp.float32)  # [T, 2F]

    lane_er = jax.lax.broadcasted_iota(jnp.int32, (tokens, num_experts * lora_r), 1)
    x2w_sum = jnp.zeros((tokens, ffn), jnp.float32)
    a2w_cat = jnp.zeros((tokens, num_experts * lora_r), jnp.float32)

    for e in range(num_experts):                                 # static unroll
        # gate/up projections with this expert's LoRA delta
        a13_e = jnp.dot(x_bf, a13_ref[e],
                        preferred_element_type=jnp.float32)      # [T, 2R]
        x13 = x13_base + jnp.dot(a13_e.astype(jnp.bfloat16), b13_ref[e],
                                 preferred_element_type=jnp.float32)   # [T, 2F]
        x2 = jax.nn.silu(x13[:, :ffn]) * x13[:, ffn:]            # [T, F] f32

        # routing weight (0 for unselected tokens), applied in f32 BEFORE the
        # down path -> exactly the gather / index_add_ formulation of PyTorch.
        gw_e = (jnp.where(idx1 == float(e), 1.0, 0.0)
                + jnp.where(idx2 == float(e), m2, 0.0)) * inv_denom    # [T, 1]
        x2w = x2 * gw_e                                          # [T, F] f32
        x2w_sum = x2w_sum + x2w

        # LoRA-A down projection against ALL experts' stacked A: the MXU does a
        # full 128-lane column pass either way; keep only this expert's 32-lane
        # chunk with a lane-iota select (no lane shifts / unaligned concat).
        a2w_all = jnp.dot(x2w.astype(jnp.bfloat16), a2cat,
                          preferred_element_type=jnp.float32)    # [T, E*R]
        in_chunk = (lane_er >= e * lora_r) & (lane_er < (e + 1) * lora_r)
        a2w_cat = a2w_cat + jnp.where(in_chunk, a2w_all, 0.0)

    # ONE mean down-projection + ONE stacked LoRA-B down-projection
    out = jnp.dot(x2w_sum.astype(jnp.bfloat16), w2t,
                  preferred_element_type=jnp.float32)            # [T, H]
    out = out + jnp.dot(a2w_cat.astype(jnp.bfloat16), b2cat,
                        preferred_element_type=jnp.float32)
    out_ref[...] = out.astype(out_ref.dtype)


# ------------------------------ wrapper --------------------------------------
def pack_params(params):
    """Pre-transpose / stack weights for the fused kernel ([in, out] layout)."""
    E, H, F, R = NUM_EXPERTS, HIDDEN, FFN, LORA_R
    gate_t = jnp.asarray(params["gate"]).T.astype(jnp.float32)          # [H, E]
    w13 = jnp.concatenate([params["w1"].T, params["w3"].T],
                          axis=1).astype(jnp.bfloat16)                  # [H, 2F]
    w2t = params["w2"].T.astype(jnp.bfloat16)                           # [F, H]
    a13 = jnp.concatenate([jnp.transpose(params["w1_a"], (0, 2, 1)),
                           jnp.transpose(params["w3_a"], (0, 2, 1))],
                          axis=2).astype(jnp.bfloat16)                  # [E, H, 2R]
    # per-expert block-diagonal B: one [T,2R] x [2R,2F] matmul serves gate+up
    b13 = np.zeros((E, 2 * R, 2 * F), np.float32)
    w1b = np.asarray(params["w1_b"])
    w3b = np.asarray(params["w3_b"])
    for e in range(E):
        b13[e, :R, :F] = w1b[e].T
        b13[e, R:, F:] = w3b[e].T
    b13 = jnp.asarray(b13, jnp.bfloat16)                                # [E, 2R, 2F]
    # LoRA-A down factors stacked along lanes: [F, E*R]
    w2a = np.asarray(params["w2_a"])                                    # [E, R, F]
    a2cat = jnp.asarray(np.transpose(w2a, (2, 0, 1)).reshape(F, E * R),
                        jnp.bfloat16)                                   # [F, E*R]
    # LoRA-B down factors stacked along K: [E*R, H]
    w2b = np.asarray(params["w2_b"])                                    # [E, H, R]
    b2cat = jnp.asarray(np.transpose(w2b, (0, 2, 1)).reshape(E * R, H),
                        jnp.bfloat16)                                   # [E*R, H]
    return {"gate_t": gate_t, "w13": w13, "w2t": w2t,
            "a13": a13, "b13": b13, "a2cat": a2cat, "b2cat": b2cat}


def mixtral_moe_lora_forward(hidden_states, packed):
    B, S, H = hidden_states.shape
    T = B * S
    E, F, R = NUM_EXPERTS, FFN, LORA_R
    ER = E * R
    x = hidden_states.reshape(T, H).astype(jnp.float32)

    args = (x, packed["gate_t"], packed["w13"], packed["w2t"],
            packed["a13"], packed["b13"], packed["a2cat"], packed["b2cat"])

    flops = (2 * T * H * E                        # router
             + 2 * T * H * (2 * F)                # shared mean gate/up proj
             + E * (2 * T * H * (2 * R)           # LoRA A gate/up (stacked per expert)
                    + 2 * T * (2 * R) * (2 * F)   # LoRA B gate/up (block-diag)
                    + 2 * T * F * ER)             # LoRA A down (full-lane pass)
             + 2 * T * F * H                      # single mean down proj
             + 2 * T * ER * H)                    # single stacked LoRA B down proj
    transcendentals = T * E + E * T * F           # softmax exp + silu sigmoid
    bytes_accessed = (sum(int(a.size) * a.dtype.itemsize for a in args)
                      + T * H * 4 + T * E * 4)

    vmem = pl.BlockSpec(memory_space=pltpu.MemorySpace.VMEM)
    out, router_logits = pl.pallas_call(
        moe_fused_kernel,
        out_shape=(jax.ShapeDtypeStruct((T, H), jnp.float32),
                   jax.ShapeDtypeStruct((T, E), jnp.float32)),
        in_specs=[vmem] * len(args),
        out_specs=(vmem, vmem),
        cost_estimate=pl.CostEstimate(flops=flops,
                                      transcendentals=transcendentals,
                                      bytes_accessed=bytes_accessed),
    )(*args)
    return out.reshape(B, S, H), router_logits


# ------------------------- deterministic parameter init ----------------------
def lora_factors(delta, r):
    """torch.svd_lowrank-style rank-r factorisation of delta [out, in]:
       returns a = diag(S) @ V.T  ([r, in]),  b = U  ([out, r])."""
    U, S, Vt = np.linalg.svd(np.asarray(delta, dtype=np.float64),
                             full_matrices=False)
    a = (np.diag(S[:r]) @ Vt[:r]).astype(np.float32)
    b = U[:, :r].astype(np.float32)
    return a, b


def make_params(key):
    E, H, F, R = NUM_EXPERTS, HIDDEN, FFN, LORA_R
    ks = jax.random.split(key, 4)
    gate = jax.random.normal(ks[0], (E, H), jnp.float32) * 0.05
    # per-expert full weights (synthetic "moe_model.experts[i].wX.weight")
    ew1 = jax.random.normal(ks[1], (E, F, H), jnp.float32) * 0.05
    ew2 = jax.random.normal(ks[2], (E, H, F), jnp.float32) * 0.05
    ew3 = jax.random.normal(ks[3], (E, F, H), jnp.float32) * 0.05
    # get_means: shared mean weights
    w1m = jnp.mean(ew1, axis=0)
    w2m = jnp.mean(ew2, axis=0)
    w3m = jnp.mean(ew3, axis=0)
    # per-expert LoRA factors from SVD of the deltas (init-time, host-side)
    w1a = np.zeros((E, R, H), np.float32); w1b = np.zeros((E, F, R), np.float32)
    w2a = np.zeros((E, R, F), np.float32); w2b = np.zeros((E, H, R), np.float32)
    w3a = np.zeros((E, R, H), np.float32); w3b = np.zeros((E, F, R), np.float32)
    for e in range(E):
        w1a[e], w1b[e] = lora_factors(ew1[e] - w1m, R)
        w2a[e], w2b[e] = lora_factors(ew2[e] - w2m, R)
        w3a[e], w3b[e] = lora_factors(ew3[e] - w3m, R)
    return {
        "gate": gate,
        "w1": w1m, "w2": w2m, "w3": w3m,
        "w1_a": jnp.asarray(w1a), "w1_b": jnp.asarray(w1b),
        "w2_a": jnp.asarray(w2a), "w2_b": jnp.asarray(w2b),
        "w3_a": jnp.asarray(w3a), "w3_b": jnp.asarray(w3b),
    }


# ------------------------------ pure-JAX reference ---------------------------
def reference_forward(hidden_states, params):
    B, S, H = hidden_states.shape
    T = B * S
    x = hidden_states.reshape(T, H).astype(jnp.float32)
    logits = x @ params["gate"].T
    probs = jax.nn.softmax(logits, axis=-1)
    rw, sel = jax.lax.top_k(probs, TOP_K)
    rw = rw / jnp.sum(rw, axis=-1, keepdims=True)
    dense_w = jnp.sum(jax.nn.one_hot(sel, NUM_EXPERTS, dtype=jnp.float32)
                      * rw[..., None], axis=1)                   # [T, E]
    final = jnp.zeros((T, H), jnp.float32)
    for e in range(NUM_EXPERTS):
        x1 = x @ params["w1"].T + (x @ params["w1_a"][e].T) @ params["w1_b"][e].T
        x3 = x @ params["w3"].T + (x @ params["w3_a"][e].T) @ params["w3_b"][e].T
        x2 = jax.nn.silu(x1) * x3
        oe = x2 @ params["w2"].T + (x2 @ params["w2_a"][e].T) @ params["w2_b"][e].T
        final = final + oe * dense_w[:, e:e + 1]
    return final.reshape(B, S, H), logits


# ----------------------------------- main ------------------------------------
if __name__ == "__main__":
    key = jax.random.PRNGKey(0)
    kx, kp = jax.random.split(key)
    params = make_params(kp)
    packed = pack_params(params)
    x = jax.random.normal(kx, (BATCH, SEQ, HIDDEN), jnp.float32)

    out, router_logits = mixtral_moe_lora_forward(x, packed)
    out = jax.block_until_ready(out)
    router_logits = jax.block_until_ready(router_logits)

    ref_out, ref_logits = reference_forward(x, params)
    assert out.shape == (BATCH, SEQ, HIDDEN)
    assert router_logits.shape == (BATCH * SEQ, NUM_EXPERTS)
    # router path is f32 end-to-end -> tight tolerance
    np.testing.assert_allclose(np.asarray(router_logits), np.asarray(ref_logits),
                               rtol=2e-3, atol=2e-3)
    # expert matmuls use bf16 MXU inputs (f32 accumulation) vs f32 reference;
    # routing renorm uses an approximate EUP reciprocal (~1e-3 rel err)
    np.testing.assert_allclose(np.asarray(out), np.asarray(ref_out),
                               rtol=5e-2, atol=5e-2)
    print("KERNEL_OK")
</pallas_src>

<mosaic_0001>
module attributes {stable_mosaic.version = 11 : i64} {
  func.func @moe_fused_kernel(%arg0: memref<16x128xf32, #tpu.memory_space<vmem>>, %arg1: memref<128x4xf32, #tpu.memory_space<vmem>>, %arg2: memref<128x512xbf16, #tpu.memory_space<vmem>>, %arg3: memref<256x128xbf16, #tpu.memory_space<vmem>>, %arg4: memref<4x128x64xbf16, #tpu.memory_space<vmem>>, %arg5: memref<4x64x512xbf16, #tpu.memory_space<vmem>>, %arg6: memref<256x128xbf16, #tpu.memory_space<vmem>>, %arg7: memref<128x128xbf16, #tpu.memory_space<vmem>>, %arg8: memref<16x128xf32, #tpu.memory_space<vmem>>, %arg9: memref<16x4xf32, #tpu.memory_space<vmem>>) attributes {dimension_semantics = [], scalar_prefetch = 0 : i64, scratch_operands = 0 : i64, tpu.core_type = #tpu.core_type<tc>} {
    %c0 = arith.constant 0 : index
    %c0_0 = arith.constant 0 : index
    %0 = vector.load %arg0[%c0, %c0_0] : memref<16x128xf32, #tpu.memory_space<vmem>>, vector<16x128xf32>
    %c0_1 = arith.constant 0 : index
    %c0_2 = arith.constant 0 : index
    %1 = vector.load %arg1[%c0_1, %c0_2] : memref<128x4xf32, #tpu.memory_space<vmem>>, vector<128x4xf32>
    %cst = arith.constant dense<0.000000e+00> : vector<16x4xf32>
    %2 = tpu.matmul %0, %1, %cst {dimension_numbers = #tpu.dot_dimension_numbers<[1], [0], [0], [1], [0, 0, 1, 1], [], []>} : vector<16x128xf32>, vector<128x4xf32>, vector<16x4xf32> -> vector<16x4xf32>
    %c0_3 = arith.constant 0 : index
    %c0_4 = arith.constant 0 : index
    %3 = vector.load %arg9[%c0_3, %c0_4] : memref<16x4xf32, #tpu.memory_space<vmem>>, vector<16x4xf32>
    tpu.vector_store %arg9[%c0_3, %c0_4], %2 {strides = array<i32>} : memref<16x4xf32, #tpu.memory_space<vmem>>, vector<16x4xf32>,
    %4 = tpu.iota {dimensions = array<i32: 1>} : vector<16x4xi32>
    %5 = arith.sitofp %4 : vector<16x4xi32> to vector<16x4xf32>
    %cst_5 = arith.constant dense<0xFF800000> : vector<16xf32>
    %6 = vector.multi_reduction <maximumf>, %2, %cst_5 [1] : vector<16x4xf32> to vector<16xf32>
    %7 = vector.shape_cast %6 : vector<16xf32> to vector<16x1xf32>
    %8 = vector.broadcast %7 : vector<16x1xf32> to vector<16x4xf32>
    %9 = arith.cmpf oeq, %2, %8 : vector<16x4xf32>
    %cst_6 = arith.constant 4.000000e+00 : f32
    %10 = vector.broadcast %cst_6 : f32 to vector<16x4xf32>
    %11 = arith.select %9, %5, %10 : vector<16x4xi1>, vector<16x4xf32>
    %cst_7 = arith.constant dense<0x7F800000> : vector<16xf32>
    %12 = vector.multi_reduction <minimumf>, %11, %cst_7 [1] : vector<16x4xf32> to vector<16xf32>
    %13 = vector.shape_cast %12 : vector<16xf32> to vector<16x1xf32>
    %14 = vector.broadcast %7 : vector<16x1xf32> to vector<16x4xf32>
    %15 = arith.subf %2, %14 : vector<16x4xf32>
    %16 = math.exp %15 : vector<16x4xf32>
    %17 = vector.broadcast %13 : vector<16x1xf32> to vector<16x4xf32>
    %18 = arith.cmpf oeq, %5, %17 : vector<16x4xf32>
    %cst_8 = arith.constant -1.000000e+00 : f32
    %19 = vector.broadcast %cst_8 : f32 to vector<16x4xf32>
    %20 = arith.select %18, %19, %16 : vector<16x4xi1>, vector<16x4xf32>
    %cst_9 = arith.constant dense<0xFF800000> : vector<16xf32>
    %21 = vector.multi_reduction <maximumf>, %20, %cst_9 [1] : vector<16x4xf32> to vector<16xf32>
    %22 = vector.shape_cast %21 : vector<16xf32> to vector<16x1xf32>
    %23 = vector.broadcast %22 : vector<16x1xf32> to vector<16x4xf32>
    %24 = arith.cmpf oeq, %20, %23 : vector<16x4xf32>
    %cst_10 = arith.constant 4.000000e+00 : f32
    %25 = vector.broadcast %cst_10 : f32 to vector<16x4xf32>
    %26 = arith.select %24, %5, %25 : vector<16x4xi1>, vector<16x4xf32>
    %cst_11 = arith.constant dense<0x7F800000> : vector<16xf32>
    %27 = vector.multi_reduction <minimumf>, %26, %cst_11 [1] : vector<16x4xf32> to vector<16xf32>
    %28 = vector.shape_cast %27 : vector<16xf32> to vector<16x1xf32>
    %cst_12 = arith.constant 1.000000e+00 : f32
    %29 = vector.broadcast %cst_12 : f32 to vector<16x1xf32>
    %30 = arith.addf %29, %22 : vector<16x1xf32>
    %31 = tpu.reciprocal %30 {approx = true} : vector<16x1xf32> -> vector<16x1xf32>
    %32 = arith.truncf %0 : vector<16x128xf32> to vector<16x128xbf16>
    %c0_13 = arith.constant 0 : index
    %c0_14 = arith.constant 0 : index
    %33 = vector.load %arg2[%c0_13, %c0_14] : memref<128x512xbf16, #tpu.memory_space<vmem>>, vector<128x512xbf16>
    %c0_15 = arith.constant 0 : index
    %c0_16 = arith.constant 0 : index
    %34 = vector.load %arg3[%c0_15, %c0_16] : memref<256x128xbf16, #tpu.memory_space<vmem>>, vector<256x128xbf16>
    %c0_17 = arith.constant 0 : index
    %c0_18 = arith.constant 0 : index
    %35 = vector.load %arg6[%c0_17, %c0_18] : memref<256x128xbf16, #tpu.memory_space<vmem>>, vector<256x128xbf16>
    %c0_19 = arith.constant 0 : index
    %c0_20 = arith.constant 0 : index
    %36 = vector.load %arg7[%c0_19, %c0_20] : memref<128x128xbf16, #tpu.memory_space<vmem>>, vector<128x128xbf16>
    %cst_21 = arith.constant dense<0.000000e+00> : vector<16x512xf32>
    %37 = tpu.matmul %32, %33, %cst_21 {dimension_numbers = #tpu.dot_dimension_numbers<[1], [0], [0], [1], [0, 0, 1, 1], [], []>} : vector<16x128xbf16>, vector<128x512xbf16>, vector<16x512xf32> -> vector<16x512xf32>
    %38 = tpu.iota {dimensions = array<i32: 1>} : vector<16x128xi32>
    %cst_22 = arith.constant 0.000000e+00 : f32
    %39 = vector.broadcast %cst_22 : f32 to vector<16x256xf32>
    %cst_23 = arith.constant 0.000000e+00 : f32
    %40 = vector.broadcast %cst_23 : f32 to vector<16x128xf32>
    %c0_24 = arith.constant 0 : index
    %c0_25 = arith.constant 0 : index
    %c0_26 = arith.constant 0 : index
    %41 = vector.load %arg4[%c0_24, %c0_25, %c0_26] : memref<4x128x64xbf16, #tpu.memory_space<vmem>>, vector<1x128x64xbf16>
    %42 = vector.shape_cast %41 : vector<1x128x64xbf16> to vector<128x64xbf16>
    %cst_27 = arith.constant dense<0.000000e+00> : vector<16x64xf32>
    %43 = tpu.matmul %32, %42, %cst_27 {dimension_numbers = #tpu.dot_dimension_numbers<[1], [0], [0], [1], [0, 0, 1, 1], [], []>} : vector<16x128xbf16>, vector<128x64xbf16>, vector<16x64xf32> -> vector<16x64xf32>
    %44 = arith.truncf %43 : vector<16x64xf32> to vector<16x64xbf16>
    %c0_28 = arith.constant 0 : index
    %c0_29 = arith.constant 0 : index
    %c0_30 = arith.constant 0 : index
    %45 = vector.load %arg5[%c0_28, %c0_29, %c0_30] : memref<4x64x512xbf16, #tpu.memory_space<vmem>>, vector<1x64x512xbf16>
    %46 = vector.shape_cast %45 : vector<1x64x512xbf16> to vector<64x512xbf16>
    %cst_31 = arith.constant dense<0.000000e+00> : vector<16x512xf32>
    %47 = tpu.matmul %44, %46, %cst_31 {dimension_numbers = #tpu.dot_dimension_numbers<[1], [0], [0], [1], [0, 0, 1, 1], [], []>} : vector<16x64xbf16>, vector<64x512xbf16>, vector<16x512xf32> -> vector<16x512xf32>
    %48 = arith.addf %37, %47 : vector<16x512xf32>
    %49 = vector.extract_strided_slice %48 {offsets = [0, 0], sizes = [16, 256], strides = [1, 1]} : vector<16x512xf32> to vector<16x256xf32>
    %50 = arith.negf %49 : vector<16x256xf32>
    %51 = math.exp %50 : vector<16x256xf32>
    %cst_32 = arith.constant 1.000000e+00 : f32
    %52 = vector.broadcast %cst_32 : f32 to vector<16x256xf32>
    %53 = arith.addf %52, %51 : vector<16x256xf32>
    %54 = arith.divf %52, %53 : vector<16x256xf32>
    %55 = arith.mulf %49, %54 : vector<16x256xf32>
    %56 = vector.extract_strided_slice %48 {offsets = [0, 256], sizes = [16, 256], strides = [1, 1]} : vector<16x512xf32> to vector<16x256xf32>
    %57 = arith.mulf %55, %56 : vector<16x256xf32>
    %cst_33 = arith.constant 0.000000e+00 : f32
    %58 = vector.broadcast %cst_33 : f32 to vector<16x1xf32>
    %59 = arith.cmpf oeq, %13, %58 : vector<16x1xf32>
    %cst_34 = arith.constant 1.000000e+00 : f32
    %cst_35 = arith.constant 0.000000e+00 : f32
    %60 = vector.broadcast %cst_34 : f32 to vector<16x1xf32>
    %61 = vector.broadcast %cst_35 : f32 to vector<16x1xf32>
    %62 = arith.select %59, %60, %61 : vector<16x1xi1>, vector<16x1xf32>
    %cst_36 = arith.constant 0.000000e+00 : f32
    %63 = vector.broadcast %cst_36 : f32 to vector<16x1xf32>
    %64 = arith.cmpf oeq, %28, %63 : vector<16x1xf32>
    %cst_37 = arith.constant 0.000000e+00 : f32
    %65 = vector.broadcast %cst_37 : f32 to vector<16x1xf32>
    %66 = arith.select %64, %22, %65 : vector<16x1xi1>, vector<16x1xf32>
    %67 = arith.addf %62, %66 : vector<16x1xf32>
    %68 = arith.mulf %67, %31 : vector<16x1xf32>
    %69 = vector.broadcast %68 : vector<16x1xf32> to vector<16x256xf32>
    %70 = arith.mulf %57, %69 : vector<16x256xf32>
    %71 = arith.addf %39, %70 : vector<16x256xf32>
    %72 = arith.truncf %70 : vector<16x256xf32> to vector<16x256xbf16>
    %cst_38 = arith.constant dense<0.000000e+00> : vector<16x128xf32>
    %73 = tpu.matmul %72, %35, %cst_38 {dimension_numbers = #tpu.dot_dimension_numbers<[1], [0], [0], [1], [0, 0, 1, 1], [], []>} : vector<16x256xbf16>, vector<256x128xbf16>, vector<16x128xf32> -> vector<16x128xf32>
    %c0_i32 = arith.constant 0 : i32
    %74 = vector.broadcast %c0_i32 : i32 to vector<16x128xi32>
    %75 = arith.cmpi sge, %38, %74 : vector<16x128xi32>
    %c32_i32 = arith.constant 32 : i32
    %76 = vector.broadcast %c32_i32 : i32 to vector<16x128xi32>
    %77 = arith.cmpi slt, %38, %76 : vector<16x128xi32>
    %78 = arith.andi %75, %77 : vector<16x128xi1>
    %cst_39 = arith.constant 0.000000e+00 : f32
    %79 = vector.broadcast %cst_39 : f32 to vector<16x128xf32>
    %80 = arith.select %78, %73, %79 : vector<16x128xi1>, vector<16x128xf32>
    %81 = arith.addf %40, %80 : vector<16x128xf32>
    %c1 = arith.constant 1 : index
    %c0_40 = arith.constant 0 : index
    %c0_41 = arith.constant 0 : index
    %82 = vector.load %arg4[%c1, %c0_40, %c0_41] : memref<4x128x64xbf16, #tpu.memory_space<vmem>>, vector<1x128x64xbf16>
    %83 = vector.shape_cast %82 : vector<1x128x64xbf16> to vector<128x64xbf16>
    %cst_42 = arith.constant dense<0.000000e+00> : vector<16x64xf32>
    %84 = tpu.matmul %32, %83, %cst_42 {dimension_numbers = #tpu.dot_dimension_numbers<[1], [0], [0], [1], [0, 0, 1, 1], [], []>} : vector<16x128xbf16>, vector<128x64xbf16>, vector<16x64xf32> -> vector<16x64xf32>
    %85 = arith.truncf %84 : vector<16x64xf32> to vector<16x64xbf16>
    %c1_43 = arith.constant 1 : index
    %c0_44 = arith.constant 0 : index
    %c0_45 = arith.constant 0 : index
    %86 = vector.load %arg5[%c1_43, %c0_44, %c0_45] : memref<4x64x512xbf16, #tpu.memory_space<vmem>>, vector<1x64x512xbf16>
    %87 = vector.shape_cast %86 : vector<1x64x512xbf16> to vector<64x512xbf16>
    %cst_46 = arith.constant dense<0.000000e+00> : vector<16x512xf32>
    %88 = tpu.matmul %85, %87, %cst_46 {dimension_numbers = #tpu.dot_dimension_numbers<[1], [0], [0], [1], [0, 0, 1, 1], [], []>} : vector<16x64xbf16>, vector<64x512xbf16>, vector<16x512xf32> -> vector<16x512xf32>
    %89 = arith.addf %37, %88 : vector<16x512xf32>
    %90 = vector.extract_strided_slice %89 {offsets = [0, 0], sizes = [16, 256], strides = [1, 1]} : vector<16x512xf32> to vector<16x256xf32>
    %91 = arith.negf %90 : vector<16x256xf32>
    %92 = math.exp %91 : vector<16x256xf32>
    %cst_47 = arith.constant 1.000000e+00 : f32
    %93 = vector.broadcast %cst_47 : f32 to vector<16x256xf32>
    %94 = arith.addf %93, %92 : vector<16x256xf32>
    %95 = arith.divf %93, %94 : vector<16x256xf32>
    %96 = arith.mulf %90, %95 : vector<16x256xf32>
    %97 = vector.extract_strided_slice %89 {offsets = [0, 256], sizes = [16, 256], strides = [1, 1]} : vector<16x512xf32> to vector<16x256xf32>
    %98 = arith.mulf %96, %97 : vector<16x256xf32>
    %cst_48 = arith.constant 1.000000e+00 : f32
    %99 = vector.broadcast %cst_48 : f32 to vector<16x1xf32>
    %100 = arith.cmpf oeq, %13, %99 : vector<16x1xf32>
    %cst_49 = arith.constant 1.000000e+00 : f32
    %cst_50 = arith.constant 0.000000e+00 : f32
    %101 = vector.broadcast %cst_49 : f32 to vector<16x1xf32>
    %102 = vector.broadcast %cst_50 : f32 to vector<16x1xf32>
    %103 = arith.select %100, %101, %102 : vector<16x1xi1>, vector<16x1xf32>
    %cst_51 = arith.constant 1.000000e+00 : f32
    %104 = vector.broadcast %cst_51 : f32 to vector<16x1xf32>
    %105 = arith.cmpf oeq, %28, %104 : vector<16x1xf32>
    %cst_52 = arith.constant 0.000000e+00 : f32
    %106 = vector.broadcast %cst_52 : f32 to vector<16x1xf32>
    %107 = arith.select %105, %22, %106 : vector<16x1xi1>, vector<16x1xf32>
    %108 = arith.addf %103, %107 : vector<16x1xf32>
    %109 = arith.mulf %108, %31 : vector<16x1xf32>
    %110 = vector.broadcast %109 : vector<16x1xf32> to vector<16x256xf32>
    %111 = arith.mulf %98, %110 : vector<16x256xf32>
    %112 = arith.addf %71, %111 : vector<16x256xf32>
    %113 = arith.truncf %111 : vector<16x256xf32> to vector<16x256xbf16>
    %cst_53 = arith.constant dense<0.000000e+00> : vector<16x128xf32>
    %114 = tpu.matmul %113, %35, %cst_53 {dimension_numbers = #tpu.dot_dimension_numbers<[1], [0], [0], [1], [0, 0, 1, 1], [], []>} : vector<16x256xbf16>, vector<256x128xbf16>, vector<16x128xf32> -> vector<16x128xf32>
    %c32_i32_54 = arith.constant 32 : i32
    %115 = vector.broadcast %c32_i32_54 : i32 to vector<16x128xi32>
    %116 = arith.cmpi sge, %38, %115 : vector<16x128xi32>
    %c64_i32 = arith.constant 64 : i32
    %117 = vector.broadcast %c64_i32 : i32 to vector<16x128xi32>
    %118 = arith.cmpi slt, %38, %117 : vector<16x128xi32>
    %119 = arith.andi %116, %118 : vector<16x128xi1>
    %cst_55 = arith.constant 0.000000e+00 : f32
    %120 = vector.broadcast %cst_55 : f32 to vector<16x128xf32>
    %121 = arith.select %119, %114, %120 : vector<16x128xi1>, vector<16x128xf32>
    %122 = arith.addf %81, %121 : vector<16x128xf32>
    %c2 = arith.constant 2 : index
    %c0_56 = arith.constant 0 : index
    %c0_57 = arith.constant 0 : index
    %123 = vector.load %arg4[%c2, %c0_56, %c0_57] : memref<4x128x64xbf16, #tpu.memory_space<vmem>>, vector<1x128x64xbf16>
    %124 = vector.shape_cast %123 : vector<1x128x64xbf16> to vector<128x64xbf16>
    %cst_58 = arith.constant dense<0.000000e+00> : vector<16x64xf32>
    %125 = tpu.matmul %32, %124, %cst_58 {dimension_numbers = #tpu.dot_dimension_numbers<[1], [0], [0], [1], [0, 0, 1, 1], [], []>} : vector<16x128xbf16>, vector<128x64xbf16>, vector<16x64xf32> -> vector<16x64xf32>
    %126 = arith.truncf %125 : vector<16x64xf32> to vector<16x64xbf16>
    %c2_59 = arith.constant 2 : index
    %c0_60 = arith.constant 0 : index
    %c0_61 = arith.constant 0 : index
    %127 = vector.load %arg5[%c2_59, %c0_60, %c0_61] : memref<4x64x512xbf16, #tpu.memory_space<vmem>>, vector<1x64x512xbf16>
    %128 = vector.shape_cast %127 : vector<1x64x512xbf16> to vector<64x512xbf16>
    %cst_62 = arith.constant dense<0.000000e+00> : vector<16x512xf32>
    %129 = tpu.matmul %126, %128, %cst_62 {dimension_numbers = #tpu.dot_dimension_numbers<[1], [0], [0], [1], [0, 0, 1, 1], [], []>} : vector<16x64xbf16>, vector<64x512xbf16>, vector<16x512xf32> -> vector<16x512xf32>
    %130 = arith.addf %37, %129 : vector<16x512xf32>
    %131 = vector.extract_strided_slice %130 {offsets = [0, 0], sizes = [16, 256], strides = [1, 1]} : vector<16x512xf32> to vector<16x256xf32>
    %132 = arith.negf %131 : vector<16x256xf32>
    %133 = math.exp %132 : vector<16x256xf32>
    %cst_63 = arith.constant 1.000000e+00 : f32
    %134 = vector.broadcast %cst_63 : f32 to vector<16x256xf32>
    %135 = arith.addf %134, %133 : vector<16x256xf32>
    %136 = arith.divf %134, %135 : vector<16x256xf32>
    %137 = arith.mulf %131, %136 : vector<16x256xf32>
    %138 = vector.extract_strided_slice %130 {offsets = [0, 256], sizes = [16, 256], strides = [1, 1]} : vector<16x512xf32> to vector<16x256xf32>
    %139 = arith.mulf %137, %138 : vector<16x256xf32>
    %cst_64 = arith.constant 2.000000e+00 : f32
    %140 = vector.broadcast %cst_64 : f32 to vector<16x1xf32>
    %141 = arith.cmpf oeq, %13, %140 : vector<16x1xf32>
    %cst_65 = arith.constant 1.000000e+00 : f32
    %cst_66 = arith.constant 0.000000e+00 : f32
    %142 = vector.broadcast %cst_65 : f32 to vector<16x1xf32>
    %143 = vector.broadcast %cst_66 : f32 to vector<16x1xf32>
    %144 = arith.select %141, %142, %143 : vector<16x1xi1>, vector<16x1xf32>
    %cst_67 = arith.constant 2.000000e+00 : f32
    %145 = vector.broadcast %cst_67 : f32 to vector<16x1xf32>
    %146 = arith.cmpf oeq, %28, %145 : vector<16x1xf32>
    %cst_68 = arith.constant 0.000000e+00 : f32
    %147 = vector.broadcast %cst_68 : f32 to vector<16x1xf32>
    %148 = arith.select %146, %22, %147 : vector<16x1xi1>, vector<16x1xf32>
    %149 = arith.addf %144, %148 : vector<16x1xf32>
    %150 = arith.mulf %149, %31 : vector<16x1xf32>
    %151 = vector.broadcast %150 : vector<16x1xf32> to vector<16x256xf32>
    %152 = arith.mulf %139, %151 : vector<16x256xf32>
    %153 = arith.addf %112, %152 : vector<16x256xf32>
    %154 = arith.truncf %152 : vector<16x256xf32> to vector<16x256xbf16>
    %cst_69 = arith.constant dense<0.000000e+00> : vector<16x128xf32>
    %155 = tpu.matmul %154, %35, %cst_69 {dimension_numbers = #tpu.dot_dimension_numbers<[1], [0], [0], [1], [0, 0, 1, 1], [], []>} : vector<16x256xbf16>, vector<256x128xbf16>, vector<16x128xf32> -> vector<16x128xf32>
    %c64_i32_70 = arith.constant 64 : i32
    %156 = vector.broadcast %c64_i32_70 : i32 to vector<16x128xi32>
    %157 = arith.cmpi sge, %38, %156 : vector<16x128xi32>
    %c96_i32 = arith.constant 96 : i32
    %158 = vector.broadcast %c96_i32 : i32 to vector<16x128xi32>
    %159 = arith.cmpi slt, %38, %158 : vector<16x128xi32>
    %160 = arith.andi %157, %159 : vector<16x128xi1>
    %cst_71 = arith.constant 0.000000e+00 : f32
    %161 = vector.broadcast %cst_71 : f32 to vector<16x128xf32>
    %162 = arith.select %160, %155, %161 : vector<16x128xi1>, vector<16x128xf32>
    %163 = arith.addf %122, %162 : vector<16x128xf32>
    %c3 = arith.constant 3 : index
    %c0_72 = arith.constant 0 : index
    %c0_73 = arith.constant 0 : index
    %164 = vector.load %arg4[%c3, %c0_72, %c0_73] : memref<4x128x64xbf16, #tpu.memory_space<vmem>>, vector<1x128x64xbf16>
    %165 = vector.shape_cast %164 : vector<1x128x64xbf16> to vector<128x64xbf16>
    %cst_74 = arith.constant dense<0.000000e+00> : vector<16x64xf32>
    %166 = tpu.matmul %32, %165, %cst_74 {dimension_numbers = #tpu.dot_dimension_numbers<[1], [0], [0], [1], [0, 0, 1, 1], [], []>} : vector<16x128xbf16>, vector<128x64xbf16>, vector<16x64xf32> -> vector<16x64xf32>
    %167 = arith.truncf %166 : vector<16x64xf32> to vector<16x64xbf16>
    %c3_75 = arith.constant 3 : index
    %c0_76 = arith.constant 0 : index
    %c0_77 = arith.constant 0 : index
    %168 = vector.load %arg5[%c3_75, %c0_76, %c0_77] : memref<4x64x512xbf16, #tpu.memory_space<vmem>>, vector<1x64x512xbf16>
    %169 = vector.shape_cast %168 : vector<1x64x512xbf16> to vector<64x512xbf16>
    %cst_78 = arith.constant dense<0.000000e+00> : vector<16x512xf32>
    %170 = tpu.matmul %167, %169, %cst_78 {dimension_numbers = #tpu.dot_dimension_numbers<[1], [0], [0], [1], [0, 0, 1, 1], [], []>} : vector<16x64xbf16>, vector<64x512xbf16>, vector<16x512xf32> -> vector<16x512xf32>
    %171 = arith.addf %37, %170 : vector<16x512xf32>
    %172 = vector.extract_strided_slice %171 {offsets = [0, 0], sizes = [16, 256], strides = [1, 1]} : vector<16x512xf32> to vector<16x256xf32>
    %173 = arith.negf %172 : vector<16x256xf32>
    %174 = math.exp %173 : vector<16x256xf32>
    %cst_79 = arith.constant 1.000000e+00 : f32
    %175 = vector.broadcast %cst_79 : f32 to vector<16x256xf32>
    %176 = arith.addf %175, %174 : vector<16x256xf32>
    %177 = arith.divf %175, %176 : vector<16x256xf32>
    %178 = arith.mulf %172, %177 : vector<16x256xf32>
    %179 = vector.extract_strided_slice %171 {offsets = [0, 256], sizes = [16, 256], strides = [1, 1]} : vector<16x512xf32> to vector<16x256xf32>
    %180 = arith.mulf %178, %179 : vector<16x256xf32>
    %cst_80 = arith.constant 3.000000e+00 : f32
    %181 = vector.broadcast %cst_80 : f32 to vector<16x1xf32>
    %182 = arith.cmpf oeq, %13, %181 : vector<16x1xf32>
    %cst_81 = arith.constant 1.000000e+00 : f32
    %cst_82 = arith.constant 0.000000e+00 : f32
    %183 = vector.broadcast %cst_81 : f32 to vector<16x1xf32>
    %184 = vector.broadcast %cst_82 : f32 to vector<16x1xf32>
    %185 = arith.select %182, %183, %184 : vector<16x1xi1>, vector<16x1xf32>
    %cst_83 = arith.constant 3.000000e+00 : f32
    %186 = vector.broadcast %cst_83 : f32 to vector<16x1xf32>
    %187 = arith.cmpf oeq, %28, %186 : vector<16x1xf32>
    %cst_84 = arith.constant 0.000000e+00 : f32
    %188 = vector.broadcast %cst_84 : f32 to vector<16x1xf32>
    %189 = arith.select %187, %22, %188 : vector<16x1xi1>, vector<16x1xf32>
    %190 = arith.addf %185, %189 : vector<16x1xf32>
    %191 = arith.mulf %190, %31 : vector<16x1xf32>
    %192 = vector.broadcast %191 : vector<16x1xf32> to vector<16x256xf32>
    %193 = arith.mulf %180, %192 : vector<16x256xf32>
    %194 = arith.addf %153, %193 : vector<16x256xf32>
    %195 = arith.truncf %193 : vector<16x256xf32> to vector<16x256xbf16>
    %cst_85 = arith.constant dense<0.000000e+00> : vector<16x128xf32>
    %196 = tpu.matmul %195, %35, %cst_85 {dimension_numbers = #tpu.dot_dimension_numbers<[1], [0], [0], [1], [0, 0, 1, 1], [], []>} : vector<16x256xbf16>, vector<256x128xbf16>, vector<16x128xf32> -> vector<16x128xf32>
    %c96_i32_86 = arith.constant 96 : i32
    %197 = vector.broadcast %c96_i32_86 : i32 to vector<16x128xi32>
    %198 = arith.cmpi sge, %38, %197 : vector<16x128xi32>
    %c128_i32 = arith.constant 128 : i32
    %199 = vector.broadcast %c128_i32 : i32 to vector<16x128xi32>
    %200 = arith.cmpi slt, %38, %199 : vector<16x128xi32>
    %201 = arith.andi %198, %200 : vector<16x128xi1>
    %cst_87 = arith.constant 0.000000e+00 : f32
    %202 = vector.broadcast %cst_87 : f32 to vector<16x128xf32>
    %203 = arith.select %201, %196, %202 : vector<16x128xi1>, vector<16x128xf32>
    %204 = arith.addf %163, %203 : vector<16x128xf32>
    %205 = arith.truncf %194 : vector<16x256xf32> to vector<16x256xbf16>
    %cst_88 = arith.constant dense<0.000000e+00> : vector<16x128xf32>
    %206 = tpu.matmul %205, %34, %cst_88 {dimension_numbers = #tpu.dot_dimension_numbers<[1], [0], [0], [1], [0, 0, 1, 1], [], []>} : vector<16x256xbf16>, vector<256x128xbf16>, vector<16x128xf32> -> vector<16x128xf32>
    %207 = arith.truncf %204 : vector<16x128xf32> to vector<16x128xbf16>
    %cst_89 = arith.constant dense<0.000000e+00> : vector<16x128xf32>
    %208 = tpu.matmul %207, %36, %cst_89 {dimension_numbers = #tpu.dot_dimension_numbers<[1], [0], [0], [1], [0, 0, 1, 1], [], []>} : vector<16x128xbf16>, vector<128x128xbf16>, vector<16x128xf32> -> vector<16x128xf32>
    %209 = arith.addf %206, %208 : vector<16x128xf32>
    %c0_90 = arith.constant 0 : index
    %c0_91 = arith.constant 0 : index
    %210 = vector.load %arg8[%c0_90, %c0_91] : memref<16x128xf32, #tpu.memory_space<vmem>>, vector<16x128xf32>
    tpu.vector_store %arg8[%c0_90, %c0_91], %209 {strides = array<i32>} : memref<16x128xf32, #tpu.memory_space<vmem>>, vector<16x128xf32>,
    return
  }
}

</mosaic_0001>

<llo_original>
// kernel: tpu_custom_call.1
$region0: #{tpu_custom_call.1}
  #allocation0 [shape = 'u32[]', space=smem, size = 0x4, offset = 0x4, fixed_abs, tag = 'smem constant byte address 0x4 - core index']
  #allocation1 [shape = 'u32[72,128]{1,0:T(1,128)}', space=vmem, size = 0x9000, scoped, tag = 'internal scratch']
  %s0 = inlined_call_operand.hbm [shape: f32[16,128], index: 0, kind: input, shape index: {}]
  %s1 = inlined_call_operand.vmem [shape: f32[128,4], index: 1, kind: input, shape index: {}]
  %s2 = inlined_call_operand.hbm [shape: bf16[128,512], index: 2, kind: input, shape index: {}]
  %s3 = inlined_call_operand.hbm [shape: bf16[256,128], index: 3, kind: input, shape index: {}]
  %s4 = inlined_call_operand.vmem [shape: bf16[4,128,64], index: 4, kind: input, shape index: {}]
  %s5 = inlined_call_operand.vmem [shape: bf16[4,64,512], index: 5, kind: input, shape index: {}]
  %s6 = inlined_call_operand.hbm [shape: bf16[256,128], index: 6, kind: input, shape index: {}]
  %s7 = inlined_call_operand.hbm [shape: bf16[128,128], index: 7, kind: input, shape index: {}]
  %s8 = inlined_call_operand.hbm [shape: f32[16,128], index: 8, kind: output, shape index: {0}]
  %s9 = inlined_call_operand.vmem [shape: f32[16,4], index: 9, kind: output, shape index: {1}]
  %10 = xla_tuple %s8, %s9
  %s11 = sld [smem:[#allocation0]]
  $region70: #{tpu_custom_call.1} parent=0
    _
  %s13 = ssub.s32 1, %s11
  %s14 = scalar_select 0, %s13, %s11
  $region1: #{tpu_custom_call.1} parent=0
    #allocation2 [shape = 'u8[8192]{0}', space=vmem, size = 0x2000, scoped, tag = 'input window, operand 0, single buffered']
    #allocation3 [shape = 's32[1]{0}', space=sflag, size = 0x4, scoped, tag = 'scoped memory for tpu_custom_call.1']
    #allocation4 [shape = 's32[1]{0}', space=sflag, size = 0x4, scoped, tag = 'scoped memory for tpu_custom_call.1']
    #allocation5 [shape = 'u8[131072]{0}', space=vmem, size = 0x20000, scoped, tag = 'input window, operand 2, single buffered']
    #allocation6 [shape = 's32[1]{0}', space=sflag, size = 0x4, scoped, tag = 'scoped memory for tpu_custom_call.1']
    #allocation7 [shape = 'u8[65536]{0}', space=vmem, size = 0x10000, scoped, tag = 'input window, operand 3, single buffered']
    #allocation8 [shape = 'u8[65536]{0}', space=vmem, size = 0x10000, scoped, tag = 'input window, operand 6, single buffered']
    #allocation9 [shape = 's32[1]{0}', space=sflag, size = 0x4, scoped, tag = 'scoped memory for tpu_custom_call.1']
    #allocation10 [shape = 'u8[32768]{0}', space=vmem, size = 0x8000, scoped, tag = 'input window, operand 7, single buffered']
    #allocation11 [shape = 'u8[8192]{0}', space=vmem, size = 0x2000, scoped, tag = 'output window, operand 0, single buffered']
    %15 = vsyncpa [#allocation3], 0
    %16 = vsyncpa [#allocation6], 0
    %17 = vsyncpa [#allocation9], 0
    %18 = vsyncpa [#allocation4], 0
    // Predicated region
    $region2: #{tpu_custom_call.1} parent=1 // pred_check
      _
    $region3: #{tpu_custom_call.1} parent=1 // pred_check_branch
      %20 = sbr.rel (0) target = $region5
    $region4: #{tpu_custom_call.1} parent=1 // pred_region
      %22 = vsyncadd [#allocation3], 0
      %s23 = sshll.u32 %s0, 4
      %s24 = int_to_ptr.hbm [resolvable:$true] %s23
      %s25 = sshll.u32 [#allocation2], 4
      %s26 = int_to_ptr.vmem [resolvable:$true] %s25
      %31 = dma.hbm_to_vmem [thread:$0]  %s24, 256, %s26, [#allocation3], 128, 128, 8
    $region5: #{tpu_custom_call.1} parent=1 // pred_fallthru
      _
    // Predicated region
    $region6: #{tpu_custom_call.1} parent=1 // pred_check
      _
    $region7: #{tpu_custom_call.1} parent=1 // pred_check_branch
      %33 = sbr.rel (0) target = $region9
    $region8: #{tpu_custom_call.1} parent=1 // pred_region
      _
    $region9: #{tpu_custom_call.1} parent=1 // pred_fallthru
      _
    // Predicated region
    $region10: #{tpu_custom_call.1} parent=1 // pred_check
      _
    $region11: #{tpu_custom_call.1} parent=1 // pred_check_branch
      %35 = sbr.rel (0) target = $region13
    $region12: #{tpu_custom_call.1} parent=1 // pred_region
      %37 = vsyncadd [#allocation6], 0
      %s38 = sshll.u32 %s2, 4
      %s39 = int_to_ptr.hbm [resolvable:$true] %s38
      %s40 = sshll.u32 [#allocation5], 4
      %s41 = int_to_ptr.vmem [resolvable:$true] %s40
      %46 = dma.hbm_to_vmem [thread:$0]  %s39, 4096, %s41, [#allocation6], 256, 256, 16
    $region13: #{tpu_custom_call.1} parent=1 // pred_fallthru
      _
    // Predicated region
    $region14: #{tpu_custom_call.1} parent=1 // pred_check
      _
    $region15: #{tpu_custom_call.1} parent=1 // pred_check_branch
      %48 = sbr.rel (0) target = $region17
    $region16: #{tpu_custom_call.1} parent=1 // pred_region
      %50 = vsyncadd [#allocation6], 0
      %s51 = sshll.u32 %s3, 4
      %s52 = int_to_ptr.hbm [resolvable:$true] %s51
      %s53 = sshll.u32 [#allocation7], 4
      %s54 = int_to_ptr.vmem [resolvable:$true] %s53
      %59 = dma.hbm_to_vmem [thread:$0]  %s52, 2048, %s54, [#allocation6], 64, 64, 4
    $region17: #{tpu_custom_call.1} parent=1 // pred_fallthru
      _
    // Predicated region
    $region18: #{tpu_custom_call.1} parent=1 // pred_check
      _
    $region19: #{tpu_custom_call.1} parent=1 // pred_check_branch
      %61 = sbr.rel (0) target = $region21
    $region20: #{tpu_custom_call.1} parent=1 // pred_region
      _
    $region21: #{tpu_custom_call.1} parent=1 // pred_fallthru
      _
    // Predicated region
    $region22: #{tpu_custom_call.1} parent=1 // pred_check
      _
    $region23: #{tpu_custom_call.1} parent=1 // pred_check_branch
      %63 = sbr.rel (0) target = $region25
    $region24: #{tpu_custom_call.1} parent=1 // pred_region
      _
    $region25: #{tpu_custom_call.1} parent=1 // pred_fallthru
      _
    // Predicated region
    $region26: #{tpu_custom_call.1} parent=1 // pred_check
      _
    $region27: #{tpu_custom_call.1} parent=1 // pred_check_branch
      %65 = sbr.rel (0) target = $region29
    $region28: #{tpu_custom_call.1} parent=1 // pred_region
      %67 = vsyncadd [#allocation9], 0
      %s68 = sshll.u32 %s6, 4
      %s69 = int_to_ptr.hbm [resolvable:$true] %s68
      %s70 = sshll.u32 [#allocation8], 4
      %s71 = int_to_ptr.vmem [resolvable:$true] %s70
      %76 = dma.hbm_to_vmem [thread:$0]  %s69, 2048, %s71, [#allocation9], 64, 64, 4
    $region29: #{tpu_custom_call.1} parent=1 // pred_fallthru
      _
    // Predicated region
    $region30: #{tpu_custom_call.1} parent=1 // pred_check
      _
    $region31: #{tpu_custom_call.1} parent=1 // pred_check_branch
      %78 = sbr.rel (0) target = $region33
    $region32: #{tpu_custom_call.1} parent=1 // pred_region
      %80 = vsyncadd [#allocation9], 0
      %s81 = sshll.u32 %s7, 4
      %s82 = int_to_ptr.hbm [resolvable:$true] %s81
      %s83 = sshll.u32 [#allocation10], 4
      %s84 = int_to_ptr.vmem [resolvable:$true] %s83
      %89 = dma.hbm_to_vmem [thread:$0]  %s82, 1024, %s84, [#allocation9], 64, 64, 4
    $region33: #{tpu_custom_call.1} parent=1 // pred_fallthru
      _
    // Predicated region
    $region34: #{tpu_custom_call.1} parent=1 // pred_check
      _
    $region35: #{tpu_custom_call.1} parent=1 // pred_check_branch
      %91 = sbr.rel (0) target = $region37
    $region36: #{tpu_custom_call.1} parent=1 // pred_region
      %93 = dma.done [#allocation3], 256
    $region37: #{tpu_custom_call.1} parent=1 // pred_fallthru
      _
    // Predicated region
    $region38: #{tpu_custom_call.1} parent=1 // pred_check
      _
    $region39: #{tpu_custom_call.1} parent=1 // pred_check_branch
      %95 = sbr.rel (0) target = $region41
    $region40: #{tpu_custom_call.1} parent=1 // pred_region
      %97 = dma.done [#allocation6], 4096
    $region41: #{tpu_custom_call.1} parent=1 // pred_fallthru
      _
    // Predicated region
    $region42: #{tpu_custom_call.1} parent=1 // pred_check
      _
    $region43: #{tpu_custom_call.1} parent=1 // pred_check_branch
      %99 = sbr.rel (0) target = $region45
    $region44: #{tpu_custom_call.1} parent=1 // pred_region
      %101 = dma.done [#allocation6], 2048
    $region45: #{tpu_custom_call.1} parent=1 // pred_fallthru
      _
    // Predicated region
    $region46: #{tpu_custom_call.1} parent=1 // pred_check
      _
    $region47: #{tpu_custom_call.1} parent=1 // pred_check_branch
      %103 = sbr.rel (0) target = $region49
    $region48: #{tpu_custom_call.1} parent=1 // pred_region
      %105 = dma.done [#allocation9], 2048
    $region49: #{tpu_custom_call.1} parent=1 // pred_fallthru
      _
    // Predicated region
    $region50: #{tpu_custom_call.1} parent=1 // pred_check
      _
    $region51: #{tpu_custom_call.1} parent=1 // pred_check_branch
      %107 = sbr.rel (0) target = $region53
    $region52: #{tpu_custom_call.1} parent=1 // pred_region
      %109 = dma.done [#allocation9], 1024
    $region53: #{tpu_custom_call.1} parent=1 // pred_fallthru
      _
    %v111 = vld [vmem:[#allocation2] sm:$0xff]
    %v112 = vld [vmem:[#allocation2 + $0x8] sm:$0xff]
    %v113 = vld [vmem:[%s1] sm:$0xff]
    %v114 = vld [vmem:[%s1 + $0x8] sm:$0xff]
    %v115 = vld [vmem:[%s1 + $0x10] sm:$0xff]
    %v116 = vld [vmem:[%s1 + $0x18] sm:$0xff]
    %v117 = vld [vmem:[%s1 + $0x20] sm:$0xff]
    %v118 = vld [vmem:[%s1 + $0x28] sm:$0xff]
    %v119 = vld [vmem:[%s1 + $0x30] sm:$0xff]
    %v120 = vld [vmem:[%s1 + $0x38] sm:$0xff]
    %v121 = vld [vmem:[%s1 + $0x40] sm:$0xff]
    %v122 = vld [vmem:[%s1 + $0x48] sm:$0xff]
    %v123 = vld [vmem:[%s1 + $0x50] sm:$0xff]
    %v124 = vld [vmem:[%s1 + $0x58] sm:$0xff]
    %v125 = vld [vmem:[%s1 + $0x60] sm:$0xff]
    %v126 = vld [vmem:[%s1 + $0x68] sm:$0xff]
    %v127 = vld [vmem:[%s1 + $0x70] sm:$0xff]
    %v128 = vld [vmem:[%s1 + $0x78] sm:$0xff]
    %129 = vmatpush.msra.mxu0 %v128
    %130 = vmatpush.msra.mxu0 %v127
    %131 = vmatpush.msra.mxu0 %v126
    %132 = vmatpush.msra.mxu0 %v125
    %133 = vmatpush.msra.mxu0 %v124
    %134 = vmatpush.msra.mxu0 %v123
    %135 = vmatpush.msra.mxu0 %v122
    %136 = vmatpush.msra.mxu0 %v121
    %137 = vmatpush.msra.mxu0 %v120
    %138 = vmatpush.msra.mxu0 %v119
    %139 = vmatpush.msra.mxu0 %v118
    %140 = vmatpush.msra.mxu0 %v117
    %141 = vmatpush.msra.mxu0 %v116
    %142 = vmatpush.msra.mxu0 %v115
    %143 = vmatpush.msra.mxu0 %v114
    %144 = vmatpush.msra.mxu0 %v113
    %145 = vmatmul.f32.gmra.mxu0 %v111
    %v146 = vpop.f32.mrf.mxu0
    %v147 = vadd.f32 0.0, %v146
    %148 = vmatmul.f32.gmra.mxu0 %v112
    %v149 = vpop.f32.mrf.mxu0
    %v150 = vadd.f32 0.0, %v149
    %151 = vdwg.mxu0
    %vm152 = vcmask 31744
    %153 = vst.msk [vmem:[%s9] sm:$0xff] %vm152, %v147
    %154 = vst.msk [vmem:[%s9 + $0x8] sm:$0xff] %vm152, %v150
    %v155 = vlaneseq
    %v156 = vand.u32 %v155, 127
    %v157 = vcvt.s32.f32 %v156
    %v158 = vsel %vm152, %v147, -inf
    %159 = vmax.xlane.f32.xlu0 %v158
    %v160 = vpop.xlane.xlu0 %159
    %v161 = vsel %vm152, %v150, -inf
    %162 = vmax.xlane.f32.xlu0 %v161
    %v163 = vpop.xlane.xlu0 %162
    %vm164 = vcmp.eq.f32.partialorder %v147, %v160
    %vm165 = vcmp.eq.f32.partialorder %v150, %v163
    %v166 = vsel %vm164, %v157, 4.0
    %v167 = vsel %vm165, %v157, 4.0
    %v168 = vsel %vm152, %v166, inf
    %169 = vmin.xlane.f32.xlu0 %v168
    %v170 = vpop.xlane.xlu0 %169
    %v171 = vsel %vm152, %v167, inf
    %172 = vmin.xlane.f32.xlu0 %v171
    %v173 = vpop.xlane.xlu0 %172
    %v174 = vsub.f32 %v147, %v160
    %v175 = vsub.f32 %v150, %v163
    %v176 = vmul.f32 %v174, 1.442695
    %v177 = vpow.pop %v176
    %v178 = vmul.f32 %v175, 1.442695
    %v179 = vpow.pop %v178
    %vm180 = vcmp.eq.f32.partialorder %v157, %v170
    %vm181 = vcmp.eq.f32.partialorder %v157, %v173
    %v182 = vsel %vm180, -1.0, %v177
    %v183 = vsel %vm181, -1.0, %v179
    %v184 = vsel %vm152, %v182, -inf
    %185 = vmax.xlane.f32.xlu0 %v184
    %v186 = vpop.xlane.xlu0 %185
    %v187 = vsel %vm152, %v183, -inf
    %188 = vmax.xlane.f32.xlu0 %v187
    %v189 = vpop.xlane.xlu0 %188
    %vm190 = vcmp.eq.f32.partialorder %v182, %v186
    %vm191 = vcmp.eq.f32.partialorder %v183, %v189
    %v192 = vsel %vm190, %v157, 4.0
    %v193 = vsel %vm191, %v157, 4.0
    %v194 = vsel %vm152, %v192, inf
    %195 = vmin.xlane.f32.xlu0 %v194
    %v196 = vpop.xlane.xlu0 %195
    %v197 = vsel %vm152, %v193, inf
    %198 = vmin.xlane.f32.xlu0 %v197
    %v199 = vpop.xlane.xlu0 %198
    %v200 = vadd.f32 %v186, 1.0
    %v201 = vadd.f32 %v189, 1.0
    %v202 = vrcp.pop %v200
    %v203 = vrcp.pop %v201
    %v204 = vpack.c.bf16 %v112, %v111
    %v205 = vld [vmem:[#allocation5] sm:$0xff]
    %v206 = vld [vmem:[#allocation5 + $0x8] sm:$0xff]
    %v207 = vld [vmem:[#allocation5 + $0x10] sm:$0xff]
    %v208 = vld [vmem:[#allocation5 + $0x18] sm:$0xff]
    %v209 = vld [vmem:[#allocation5 + $0x20] sm:$0xff]
    %v210 = vld [vmem:[#allocation5 + $0x28] sm:$0xff]
    %v211 = vld [vmem:[#allocation5 + $0x30] sm:$0xff]
    %v212 = vld [vmem:[#allocation5 + $0x38] sm:$0xff]
    %v213 = vld [vmem:[#allocation5 + $0x40] sm:$0xff]
    %v214 = vld [vmem:[#allocation5 + $0x48] sm:$0xff]
    %v215 = vld [vmem:[#allocation5 + $0x50] sm:$0xff]
    %v216 = vld [vmem:[#allocation5 + $0x58] sm:$0xff]
    %v217 = vld [vmem:[#allocation5 + $0x60] sm:$0xff]
    %v218 = vld [vmem:[#allocation5 + $0x68] sm:$0xff]
    %v219 = vld [vmem:[#allocation5 + $0x70] sm:$0xff]
    %v220 = vld [vmem:[#allocation5 + $0x78] sm:$0xff]
    %v221 = vld [vmem:[#allocation5 + $0x80] sm:$0xff]
    %v222 = vld [vmem:[#allocation5 + $0x88] sm:$0xff]
    %v223 = vld [vmem:[#allocation5 + $0x90] sm:$0xff]
    %v224 = vld [vmem:[#allocation5 + $0x98] sm:$0xff]
    %v225 = vld [vmem:[#allocation5 + $0xa0] sm:$0xff]
    %v226 = vld [vmem:[#allocation5 + $0xa8] sm:$0xff]
    %v227 = vld [vmem:[#allocation5 + $0xb0] sm:$0xff]
    %v228 = vld [vmem:[#allocation5 + $0xb8] sm:$0xff]
    %v229 = vld [vmem:[#allocation5 + $0xc0] sm:$0xff]
    %v230 = vld [vmem:[#allocation5 + $0xc8] sm:$0xff]
    %v231 = vld [vmem:[#allocation5 + $0xd0] sm:$0xff]
    %v232 = vld [vmem:[#allocation5 + $0xd8] sm:$0xff]
    %v233 = vld [vmem:[#allocation5 + $0xe0] sm:$0xff]
    %v234 = vld [vmem:[#allocation5 + $0xe8] sm:$0xff]
    %v235 = vld [vmem:[#allocation5 + $0xf0] sm:$0xff]
    %v236 = vld [vmem:[#allocation5 + $0xf8] sm:$0xff]
    %v237 = vld [vmem:[#allocation7] sm:$0xf]
    %v238 = vld [vmem:[#allocation7 + $0x4] sm:$0xf]
    %v239 = vld [vmem:[#allocation7 + $0x8] sm:$0xf]
    %v240 = vld [vmem:[#allocation7 + $0xc] sm:$0xf]
    %v241 = vld [vmem:[#allocation7 + $0x10] sm:$0xf]
    %v242 = vld [vmem:[#allocation7 + $0x14] sm:$0xf]
    %v243 = vld [vmem:[#allocation7 + $0x18] sm:$0xf]
    %v244 = vld [vmem:[#allocation7 + $0x1c] sm:$0xf]
    %v245 = vld [vmem:[#allocation7 + $0x20] sm:$0xf]
    %v246 = vld [vmem:[#allocation7 + $0x24] sm:$0xf]
    %v247 = vld [vmem:[#allocation7 + $0x28] sm:$0xf]
    %v248 = vld [vmem:[#allocation7 + $0x2c] sm:$0xf]
    %v249 = vld [vmem:[#allocation7 + $0x30] sm:$0xf]
    %v250 = vld [vmem:[#allocation7 + $0x34] sm:$0xf]
    %v251 = vld [vmem:[#allocation7 + $0x38] sm:$0xf]
    %v252 = vld [vmem:[#allocation7 + $0x3c] sm:$0xf]
    %v253 = vld [vmem:[#allocation7 + $0x40] sm:$0xf]
    %v254 = vld [vmem:[#allocation7 + $0x44] sm:$0xf]
    %v255 = vld [vmem:[#allocation7 + $0x48] sm:$0xf]
    %v256 = vld [vmem:[#allocation7 + $0x4c] sm:$0xf]
    %v257 = vld [vmem:[#allocation7 + $0x50] sm:$0xf]
    %v258 = vld [vmem:[#allocation7 + $0x54] sm:$0xf]
    %v259 = vld [vmem:[#allocation7 + $0x58] sm:$0xf]
    %v260 = vld [vmem:[#allocation7 + $0x5c] sm:$0xf]
    %v261 = vld [vmem:[#allocation7 + $0x60] sm:$0xf]
    %v262 = vld [vmem:[#allocation7 + $0x64] sm:$0xf]
    %v263 = vld [vmem:[#allocation7 + $0x68] sm:$0xf]
    %v264 = vld [vmem:[#allocation7 + $0x6c] sm:$0xf]
    %v265 = vld [vmem:[#allocation7 + $0x70] sm:$0xf]
    %v266 = vld [vmem:[#allocation7 + $0x74] sm:$0xf]
    %v267 = vld [vmem:[#allocation7 + $0x78] sm:$0xf]
    %v268 = vld [vmem:[#allocation7 + $0x7c] sm:$0xf]
    %v269 = vld [vmem:[#allocation8] sm:$0xf]
    %v270 = vld [vmem:[#allocation8 + $0x4] sm:$0xf]
    %v271 = vld [vmem:[#allocation8 + $0x8] sm:$0xf]
    %v272 = vld [vmem:[#allocation8 + $0xc] sm:$0xf]
    %v273 = vld [vmem:[#allocation8 + $0x10] sm:$0xf]
    %v274 = vld [vmem:[#allocation8 + $0x14] sm:$0xf]
    %v275 = vld [vmem:[#allocation8 + $0x18] sm:$0xf]
    %v276 = vld [vmem:[#allocation8 + $0x1c] sm:$0xf]
    %v277 = vld [vmem:[#allocation8 + $0x20] sm:$0xf]
    %v278 = vld [vmem:[#allocation8 + $0x24] sm:$0xf]
    %v279 = vld [vmem:[#allocation8 + $0x28] sm:$0xf]
    %v280 = vld [vmem:[#allocation8 + $0x2c] sm:$0xf]
    %v281 = vld [vmem:[#allocation8 + $0x30] sm:$0xf]
    %v282 = vld [vmem:[#allocation8 + $0x34] sm:$0xf]
    %v283 = vld [vmem:[#allocation8 + $0x38] sm:$0xf]
    %v284 = vld [vmem:[#allocation8 + $0x3c] sm:$0xf]
    %v285 = vld [vmem:[#allocation8 + $0x40] sm:$0xf]
    %v286 = vld [vmem:[#allocation8 + $0x44] sm:$0xf]
    %v287 = vld [vmem:[#allocation8 + $0x48] sm:$0xf]
    %v288 = vld [vmem:[#allocation8 + $0x4c] sm:$0xf]
    %v289 = vld [vmem:[#allocation8 + $0x50] sm:$0xf]
    %v290 = vld [vmem:[#allocation8 + $0x54] sm:$0xf]
    %v291 = vld [vmem:[#allocation8 + $0x58] sm:$0xf]
    %v292 = vld [vmem:[#allocation8 + $0x5c] sm:$0xf]
    %v293 = vld [vmem:[#allocation8 + $0x60] sm:$0xf]
    %v294 = vld [vmem:[#allocation8 + $0x64] sm:$0xf]
    %v295 = vld [vmem:[#allocation8 + $0x68] sm:$0xf]
    %v296 = vld [vmem:[#allocation8 + $0x6c] sm:$0xf]
    %v297 = vld [vmem:[#allocation8 + $0x70] sm:$0xf]
    %v298 = vld [vmem:[#allocation8 + $0x74] sm:$0xf]
    %v299 = vld [vmem:[#allocation8 + $0x78] sm:$0xf]
    %v300 = vld [vmem:[#allocation8 + $0x7c] sm:$0xf]
    %v301 = vld [vmem:[#allocation10] sm:$0xf]
    %v302 = vld [vmem:[#allocation10 + $0x4] sm:$0xf]
    %v303 = vld [vmem:[#allocation10 + $0x8] sm:$0xf]
    %v304 = vld [vmem:[#allocation10 + $0xc] sm:$0xf]
    %v305 = vld [vmem:[#allocation10 + $0x10] sm:$0xf]
    %v306 = vld [vmem:[#allocation10 + $0x14] sm:$0xf]
    %v307 = vld [vmem:[#allocation10 + $0x18] sm:$0xf]
    %v308 = vld [vmem:[#allocation10 + $0x1c] sm:$0xf]
    %v309 = vld [vmem:[#allocation10 + $0x20] sm:$0xf]
    %v310 = vld [vmem:[#allocation10 + $0x24] sm:$0xf]
    %v311 = vld [vmem:[#allocation10 + $0x28] sm:$0xf]
    %v312 = vld [vmem:[#allocation10 + $0x2c] sm:$0xf]
    %v313 = vld [vmem:[#allocation10 + $0x30] sm:$0xf]
    %v314 = vld [vmem:[#allocation10 + $0x34] sm:$0xf]
    %v315 = vld [vmem:[#allocation10 + $0x38] sm:$0xf]
    %v316 = vld [vmem:[#allocation10 + $0x3c] sm:$0xf]
    %v349 = vunpack.c.l.b16 %v205
    %v350 = vunpack.c.h.b16 %v205
    %v351 = vunpack.c.l.b16 %v206
    %v352 = vunpack.c.h.b16 %v206
    %v353 = vunpack.c.l.b16 %v207
    %v354 = vunpack.c.h.b16 %v207
    %v355 = vunpack.c.l.b16 %v208
    %v356 = vunpack.c.h.b16 %v208
    %v357 = vunpack.c.l.b16 %v209
    %v358 = vunpack.c.h.b16 %v209
    %v359 = vunpack.c.l.b16 %v210
    %v360 = vunpack.c.h.b16 %v210
    %v361 = vunpack.c.l.b16 %v211
    %v362 = vunpack.c.h.b16 %v211
    %v363 = vunpack.c.l.b16 %v212
    %v364 = vunpack.c.h.b16 %v212
    %v365 = vunpack.c.l.b16 %v213
    %v366 = vunpack.c.h.b16 %v213
    %v367 = vunpack.c.l.b16 %v214
    %v368 = vunpack.c.h.b16 %v214
    %v369 = vunpack.c.l.b16 %v215
    %v370 = vunpack.c.h.b16 %v215
    %v371 = vunpack.c.l.b16 %v216
    %v372 = vunpack.c.h.b16 %v216
    %v373 = vunpack.c.l.b16 %v217
    %v374 = vunpack.c.h.b16 %v217
    %v375 = vunpack.c.l.b16 %v218
    %v376 = vunpack.c.h.b16 %v218
    %v377 = vunpack.c.l.b16 %v219
    %v378 = vunpack.c.h.b16 %v219
    %v379 = vunpack.c.l.b16 %v220
    %v380 = vunpack.c.h.b16 %v220
    %v381 = vunpack.c.l.b16 %v221
    %v382 = vunpack.c.h.b16 %v221
    %v383 = vunpack.c.l.b16 %v222
    %v384 = vunpack.c.h.b16 %v222
    %v385 = vunpack.c.l.b16 %v223
    %v386 = vunpack.c.h.b16 %v223
    %v387 = vunpack.c.l.b16 %v224
    %v388 = vunpack.c.h.b16 %v224
    %v389 = vunpack.c.l.b16 %v225
    %v390 = vunpack.c.h.b16 %v225
    %v391 = vunpack.c.l.b16 %v226
    %v392 = vunpack.c.h.b16 %v226
    %v393 = vunpack.c.l.b16 %v227
    %v394 = vunpack.c.h.b16 %v227
    %v395 = vunpack.c.l.b16 %v228
    %v396 = vunpack.c.h.b16 %v228
    %v397 = vunpack.c.l.b16 %v229
    %v398 = vunpack.c.h.b16 %v229
    %v399 = vunpack.c.l.b16 %v230
    %v400 = vunpack.c.h.b16 %v230
    %v401 = vunpack.c.l.b16 %v231
    %v402 = vunpack.c.h.b16 %v231
    %v403 = vunpack.c.l.b16 %v232
    %v404 = vunpack.c.h.b16 %v232
    %v405 = vunpack.c.l.b16 %v233
    %v406 = vunpack.c.h.b16 %v233
    %v407 = vunpack.c.l.b16 %v234
    %v408 = vunpack.c.h.b16 %v234
    %v409 = vunpack.c.l.b16 %v235
    %v410 = vunpack.c.h.b16 %v235
    %v411 = vunpack.c.l.b16 %v236
    %v412 = vunpack.c.h.b16 %v236
    %v413 = vpack.c.b16 %v353, %v349
    %v414 = vpack.c.b16 %v354, %v350
    %v415 = vpack.c.b16 %v355, %v351
    %v416 = vpack.c.b16 %v356, %v352
    %v417 = vpack.c.b16 %v361, %v357
    %v418 = vpack.c.b16 %v362, %v358
    %v419 = vpack.c.b16 %v363, %v359
    %v420 = vpack.c.b16 %v364, %v360
    %v421 = vpack.c.b16 %v369, %v365
    %v422 = vpack.c.b16 %v370, %v366
    %v423 = vpack.c.b16 %v371, %v367
    %v424 = vpack.c.b16 %v372, %v368
    %v425 = vpack.c.b16 %v377, %v373
    %v426 = vpack.c.b16 %v378, %v374
    %v427 = vpack.c.b16 %v379, %v375
    %v428 = vpack.c.b16 %v380, %v376
    %v429 = vpack.c.b16 %v385, %v381
    %v430 = vpack.c.b16 %v386, %v382
    %v431 = vpack.c.b16 %v387, %v383
    %v432 = vpack.c.b16 %v388, %v384
    %v433 = vpack.c.b16 %v393, %v389
    %v434 = vpack.c.b16 %v394, %v390
    %v435 = vpack.c.b16 %v395, %v391
    %v436 = vpack.c.b16 %v396, %v392
    %v437 = vpack.c.b16 %v401, %v397
    %v438 = vpack.c.b16 %v402, %v398
    %v439 = vpack.c.b16 %v403, %v399
    %v440 = vpack.c.b16 %v404, %v400
    %v441 = vpack.c.b16 %v409, %v405
    %v442 = vpack.c.b16 %v410, %v406
    %v443 = vpack.c.b16 %v411, %v407
    %v444 = vpack.c.b16 %v412, %v408
    %477 = vmatpush.bf16.msra.mxu0 %v441
    %478 = vmatpush.bf16.msra.mxu0 %v437
    %479 = vmatpush.bf16.msra.mxu0 %v433
    %480 = vmatpush.bf16.msra.mxu0 %v429
    %481 = vmatpush.bf16.msra.mxu0 %v425
    %482 = vmatpush.bf16.msra.mxu0 %v421
    %483 = vmatpush.bf16.msra.mxu0 %v417
    %484 = vmatpush.bf16.msra.mxu0 %v413
    %485 = vmatmul.bf16.gmra.mxu0 %v204
    %v486 = vpop.f32.mrf.mxu0
    %v487 = vadd.f32 0.0, %v486
    %v488 = vpop.f32.mrf.mxu0
    %v489 = vadd.f32 0.0, %v488
    %490 = vdwg.mxu0
    %491 = vmatpush.bf16.msra.mxu0 %v442
    %492 = vmatpush.bf16.msra.mxu0 %v438
    %493 = vmatpush.bf16.msra.mxu0 %v434
    %494 = vmatpush.bf16.msra.mxu0 %v430
    %495 = vmatpush.bf16.msra.mxu0 %v426
    %496 = vmatpush.bf16.msra.mxu0 %v422
    %497 = vmatpush.bf16.msra.mxu0 %v418
    %498 = vmatpush.bf16.msra.mxu0 %v414
    %499 = vmatmul.bf16.gmra.mxu0 %v204
    %v500 = vpop.f32.mrf.mxu0
    %v501 = vadd.f32 0.0, %v500
    %v502 = vpop.f32.mrf.mxu0
    %v503 = vadd.f32 0.0, %v502
    %504 = vdwg.mxu0
    %505 = vmatpush.bf16.msra.mxu0 %v443
    %506 = vmatpush.bf16.msra.mxu0 %v439
    %507 = vmatpush.bf16.msra.mxu0 %v435
    %508 = vmatpush.bf16.msra.mxu0 %v431
    %509 = vmatpush.bf16.msra.mxu0 %v427
    %510 = vmatpush.bf16.msra.mxu0 %v423
    %511 = vmatpush.bf16.msra.mxu0 %v419
    %512 = vmatpush.bf16.msra.mxu0 %v415
    %513 = vmatmul.bf16.gmra.mxu0 %v204
    %v514 = vpop.f32.mrf.mxu0
    %v515 = vadd.f32 0.0, %v514
    %v516 = vpop.f32.mrf.mxu0
    %v517 = vadd.f32 0.0, %v516
    %518 = vdwg.mxu0
    %519 = vmatpush.bf16.msra.mxu0 %v444
    %520 = vmatpush.bf16.msra.mxu0 %v440
    %521 = vmatpush.bf16.msra.mxu0 %v436
    %522 = vmatpush.bf16.msra.mxu0 %v432
    %523 = vmatpush.bf16.msra.mxu0 %v428
    %524 = vmatpush.bf16.msra.mxu0 %v424
    %525 = vmatpush.bf16.msra.mxu0 %v420
    %526 = vmatpush.bf16.msra.mxu0 %v416
    %527 = vmatmul.bf16.gmra.mxu0 %v204
    %v528 = vpop.f32.mrf.mxu0
    %v529 = vadd.f32 0.0, %v528
    %v530 = vpop.f32.mrf.mxu0
    %v531 = vadd.f32 0.0, %v530
    %532 = vdwg.mxu0
    %v533 = vld [vmem:[%s4] sm:$0xf]
    %v534 = vld [vmem:[%s4 + $0x4] sm:$0xf]
    %v535 = vld [vmem:[%s4 + $0x8] sm:$0xf]
    %v536 = vld [vmem:[%s4 + $0xc] sm:$0xf]
    %v537 = vld [vmem:[%s4 + $0x10] sm:$0xf]
    %v538 = vld [vmem:[%s4 + $0x14] sm:$0xf]
    %v539 = vld [vmem:[%s4 + $0x18] sm:$0xf]
    %v540 = vld [vmem:[%s4 + $0x1c] sm:$0xf]
    %v541 = vld [vmem:[%s4 + $0x20] sm:$0xf]
    %v542 = vld [vmem:[%s4 + $0x24] sm:$0xf]
    %v543 = vld [vmem:[%s4 + $0x28] sm:$0xf]
    %v544 = vld [vmem:[%s4 + $0x2c] sm:$0xf]
    %v545 = vld [vmem:[%s4 + $0x30] sm:$0xf]
    %v546 = vld [vmem:[%s4 + $0x34] sm:$0xf]
    %v547 = vld [vmem:[%s4 + $0x38] sm:$0xf]
    %v548 = vld [vmem:[%s4 + $0x3c] sm:$0xf]
    %v565 = vunpack.c.l.b16 %v533
    %v566 = vunpack.c.l.b16 %v534
    %v567 = vunpack.c.l.b16 %v535
    %v568 = vunpack.c.l.b16 %v536
    %v569 = vunpack.c.l.b16 %v537
    %v570 = vunpack.c.l.b16 %v538
    %v571 = vunpack.c.l.b16 %v539
    %v572 = vunpack.c.l.b16 %v540
    %v573 = vunpack.c.l.b16 %v541
    %v574 = vunpack.c.l.b16 %v542
    %v575 = vunpack.c.l.b16 %v543
    %v576 = vunpack.c.l.b16 %v544
    %v577 = vunpack.c.l.b16 %v545
    %v578 = vunpack.c.l.b16 %v546
    %v579 = vunpack.c.l.b16 %v547
    %v580 = vunpack.c.l.b16 %v548
    %v581 = vpack.c.b16 %v566, %v565
    %v582 = vpack.c.b16 %v568, %v567
    %v583 = vpack.c.b16 %v570, %v569
    %v584 = vpack.c.b16 %v572, %v571
    %v585 = vpack.c.b16 %v574, %v573
    %v586 = vpack.c.b16 %v576, %v575
    %v587 = vpack.c.b16 %v578, %v577
    %v588 = vpack.c.b16 %v580, %v579
    %597 = vmatpush.bf16.msra.mxu0 %v588
    %598 = vmatpush.bf16.msra.mxu0 %v587
    %599 = vmatpush.bf16.msra.mxu0 %v586
    %600 = vmatpush.bf16.msra.mxu0 %v585
    %601 = vmatpush.bf16.msra.mxu0 %v584
    %602 = vmatpush.bf16.msra.mxu0 %v583
    %603 = vmatpush.bf16.msra.mxu0 %v582
    %604 = vmatpush.bf16.msra.mxu0 %v581
    %605 = vmatmul.bf16.gmra.mxu0 %v204
    %v606 = vpop.f32.mrf.mxu0
    %v607 = vadd.f32 0.0, %v606
    %v608 = vpop.f32.mrf.mxu0
    %v609 = vadd.f32 0.0, %v608
    %610 = vdwg.mxu0
    %v611 = vpack.c.bf16 %v609, %v607
    %v612 = vld [vmem:[%s5] sm:$0xff]
    %v613 = vld [vmem:[%s5 + $0x8] sm:$0xff]
    %v614 = vld [vmem:[%s5 + $0x10] sm:$0xff]
    %v615 = vld [vmem:[%s5 + $0x18] sm:$0xff]
    %v616 = vld [vmem:[%s5 + $0x20] sm:$0xff]
    %v617 = vld [vmem:[%s5 + $0x28] sm:$0xff]
    %v618 = vld [vmem:[%s5 + $0x30] sm:$0xff]
    %v619 = vld [vmem:[%s5 + $0x38] sm:$0xff]
    %v620 = vld [vmem:[%s5 + $0x40] sm:$0xff]
    %v621 = vld [vmem:[%s5 + $0x48] sm:$0xff]
    %v622 = vld [vmem:[%s5 + $0x50] sm:$0xff]
    %v623 = vld [vmem:[%s5 + $0x58] sm:$0xff]
    %v624 = vld [vmem:[%s5 + $0x60] sm:$0xff]
    %v625 = vld [vmem:[%s5 + $0x68] sm:$0xff]
    %v626 = vld [vmem:[%s5 + $0x70] sm:$0xff]
    %v627 = vld [vmem:[%s5 + $0x78] sm:$0xff]
    %v644 = vunpack.c.l.b16 %v612
    %v645 = vunpack.c.h.b16 %v612
    %v646 = vunpack.c.l.b16 %v613
    %v647 = vunpack.c.h.b16 %v613
    %v648 = vunpack.c.l.b16 %v614
    %v649 = vunpack.c.h.b16 %v614
    %v650 = vunpack.c.l.b16 %v615
    %v651 = vunpack.c.h.b16 %v615
    %v652 = vunpack.c.l.b16 %v616
    %v653 = vunpack.c.h.b16 %v616
    %v654 = vunpack.c.l.b16 %v617
    %v655 = vunpack.c.h.b16 %v617
    %v656 = vunpack.c.l.b16 %v618
    %v657 = vunpack.c.h.b16 %v618
    %v658 = vunpack.c.l.b16 %v619
    %v659 = vunpack.c.h.b16 %v619
    %v660 = vunpack.c.l.b16 %v620
    %v661 = vunpack.c.h.b16 %v620
    %v662 = vunpack.c.l.b16 %v621
    %v663 = vunpack.c.h.b16 %v621
    %v664 = vunpack.c.l.b16 %v622
    %v665 = vunpack.c.h.b16 %v622
    %v666 = vunpack.c.l.b16 %v623
    %v667 = vunpack.c.h.b16 %v623
    %v668 = vunpack.c.l.b16 %v624
    %v669 = vunpack.c.h.b16 %v624
    %v670 = vunpack.c.l.b16 %v625
    %v671 = vunpack.c.h.b16 %v625
    %v672 = vunpack.c.l.b16 %v626
    %v673 = vunpack.c.h.b16 %v626
    %v674 = vunpack.c.l.b16 %v627
    %v675 = vunpack.c.h.b16 %v627
    %v676 = vpack.c.b16 %v648, %v644
    %v677 = vpack.c.b16 %v649, %v645
    %v678 = vpack.c.b16 %v650, %v646
    %v679 = vpack.c.b16 %v651, %v647
    %v680 = vpack.c.b16 %v656, %v652
    %v681 = vpack.c.b16 %v657, %v653
    %v682 = vpack.c.b16 %v658, %v654
    %v683 = vpack.c.b16 %v659, %v655
    %v684 = vpack.c.b16 %v664, %v660
    %v685 = vpack.c.b16 %v665, %v661
    %v686 = vpack.c.b16 %v666, %v662
    %v687 = vpack.c.b16 %v667, %v663
    %v688 = vpack.c.b16 %v672, %v668
    %v689 = vpack.c.b16 %v673, %v669
    %v690 = vpack.c.b16 %v674, %v670
    %v691 = vpack.c.b16 %v675, %v671
    %vm708 = vcmask 523264
    %v710 = vsel %vm708, %v611, 0
    %712 = vmatpush.bf16.msra.mxu0 0
    %713 = vmatpush.bf16.msra.mxu0 0
    %714 = vmatpush.bf16.msra.mxu0 0
    %715 = vmatpush.bf16.msra.mxu0 0
    %716 = vmatpush.bf16.msra.mxu0 %v688
    %717 = vmatpush.bf16.msra.mxu0 %v684
    %718 = vmatpush.bf16.msra.mxu0 %v680
    %719 = vmatpush.bf16.msra.mxu0 %v676
    %720 = vmatmul.bf16.gmra.mxu0 %v710
    %v721 = vpop.f32.mrf.mxu0
    %v722 = vadd.f32 0.0, %v721
    %v723 = vpop.f32.mrf.mxu0
    %v724 = vadd.f32 0.0, %v723
    %725 = vdwg.mxu0
    %726 = vmatpush.bf16.msra.mxu0 0
    %727 = vmatpush.bf16.msra.mxu0 0
    %728 = vmatpush.bf16.msra.mxu0 0
    %729 = vmatpush.bf16.msra.mxu0 0
    %730 = vmatpush.bf16.msra.mxu0 %v689
    %731 = vmatpush.bf16.msra.mxu0 %v685
    %732 = vmatpush.bf16.msra.mxu0 %v681
    %733 = vmatpush.bf16.msra.mxu0 %v677
    %734 = vmatmul.bf16.gmra.mxu0 %v710
    %v735 = vpop.f32.mrf.mxu0
    %v736 = vadd.f32 0.0, %v735
    %v737 = vpop.f32.mrf.mxu0
    %v738 = vadd.f32 0.0, %v737
    %739 = vdwg.mxu0
    %740 = vmatpush.bf16.msra.mxu0 0
    %741 = vmatpush.bf16.msra.mxu0 0
    %742 = vmatpush.bf16.msra.mxu0 0
    %743 = vmatpush.bf16.msra.mxu0 0
    %744 = vmatpush.bf16.msra.mxu0 %v690
    %745 = vmatpush.bf16.msra.mxu0 %v686
    %746 = vmatpush.bf16.msra.mxu0 %v682
    %747 = vmatpush.bf16.msra.mxu0 %v678
    %748 = vmatmul.bf16.gmra.mxu0 %v710
    %v749 = vpop.f32.mrf.mxu0
    %v750 = vadd.f32 0.0, %v749
    %v751 = vpop.f32.mrf.mxu0
    %v752 = vadd.f32 0.0, %v751
    %753 = vdwg.mxu0
    %754 = vmatpush.bf16.msra.mxu0 0
    %755 = vmatpush.bf16.msra.mxu0 0
    %756 = vmatpush.bf16.msra.mxu0 0
    %757 = vmatpush.bf16.msra.mxu0 0
    %758 = vmatpush.bf16.msra.mxu0 %v691
    %759 = vmatpush.bf16.msra.mxu0 %v687
    %760 = vmatpush.bf16.msra.mxu0 %v683
    %761 = vmatpush.bf16.msra.mxu0 %v679
    %762 = vmatmul.bf16.gmra.mxu0 %v710
    %v763 = vpop.f32.mrf.mxu0
    %v764 = vadd.f32 0.0, %v763
    %v765 = vpop.f32.mrf.mxu0
    %v766 = vadd.f32 0.0, %v765
    %767 = vdwg.mxu0
    %v768 = vadd.f32 %v487, %v722
    %v769 = vadd.f32 %v501, %v736
    %v770 = vadd.f32 %v515, %v750
    %v771 = vadd.f32 %v529, %v764
    %v772 = vadd.f32 %v489, %v724
    %v773 = vadd.f32 %v503, %v738
    %v774 = vadd.f32 %v517, %v752
    %v775 = vadd.f32 %v531, %v766
    %v776 = vxor.u32 %v768, 2147483648
    %v777 = vxor.u32 %v769, 2147483648
    %v778 = vxor.u32 %v772, 2147483648
    %v779 = vxor.u32 %v773, 2147483648
    %v780 = vmul.f32 %v776, 1.442695
    %v781 = vpow.pop %v780
    %v782 = vmul.f32 %v777, 1.442695
    %v783 = vpow.pop %v782
    %v784 = vmul.f32 %v778, 1.442695
    %v785 = vpow.pop %v784
    %v786 = vmul.f32 %v779, 1.442695
    %v787 = vpow.pop %v786
    %v788 = vadd.f32 %v781, 1.0
    %v789 = vadd.f32 %v783, 1.0
    %v790 = vadd.f32 %v785, 1.0
    %v791 = vadd.f32 %v787, 1.0
    %v792 = vrcp.pop %v788
    %v793 = vmul.f32 %v788, %v792
    %v794 = vsub.f32 1.0, %v793
    %v795 = vmul.f32 %v792, %v794
    %v796 = vadd.f32 %v792, %v795
    %vm797 = vweird.f32 %v788
    %vm798 = vweird.f32 %v792
    %vm799 = vmor %vm797, %vm798
    %v800 = vsel %vm799, %v792, %v796
    %v801 = vand.u32 2147483647, %v788
    %vm802 = vcmp.eq.f32.partialorder %v801, 8.507059e+37
    %v803 = vand.u32 %v788, 2147483648
    %v804 = vor.u32 1.1754944e-38, %v803
    %v805 = vsel %vm802, %v804, %v800
    %v806 = vmul.f32 1.0, %v805
    %v807 = vrcp.pop %v789
    %v808 = vmul.f32 %v789, %v807
    %v809 = vsub.f32 1.0, %v808
    %v810 = vmul.f32 %v807, %v809
    %v811 = vadd.f32 %v807, %v810
    %vm812 = vweird.f32 %v789
    %vm813 = vweird.f32 %v807
    %vm814 = vmor %vm812, %vm813
    %v815 = vsel %vm814, %v807, %v811
    %v816 = vand.u32 2147483647, %v789
    %vm817 = vcmp.eq.f32.partialorder %v816, 8.507059e+37
    %v818 = vand.u32 %v789, 2147483648
    %v819 = vor.u32 1.1754944e-38, %v818
    %v820 = vsel %vm817, %v819, %v815
    %v821 = vmul.f32 1.0, %v820
    %v822 = vrcp.pop %v790
    %v823 = vmul.f32 %v790, %v822
    %v824 = vsub.f32 1.0, %v823
    %v825 = vmul.f32 %v822, %v824
    %v826 = vadd.f32 %v822, %v825
    %vm827 = vweird.f32 %v790
    %vm828 = vweird.f32 %v822
    %vm829 = vmor %vm827, %vm828
    %v830 = vsel %vm829, %v822, %v826
    %v831 = vand.u32 2147483647, %v790
    %vm832 = vcmp.eq.f32.partialorder %v831, 8.507059e+37
    %v833 = vand.u32 %v790, 2147483648
    %v834 = vor.u32 1.1754944e-38, %v833
    %v835 = vsel %vm832, %v834, %v830
    %v836 = vmul.f32 1.0, %v835
    %v837 = vrcp.pop %v791
    %v838 = vmul.f32 %v791, %v837
    %v839 = vsub.f32 1.0, %v838
    %v840 = vmul.f32 %v837, %v839
    %v841 = vadd.f32 %v837, %v840
    %vm842 = vweird.f32 %v791
    %vm843 = vweird.f32 %v837
    %vm844 = vmor %vm842, %vm843
    %v845 = vsel %vm844, %v837, %v841
    %v846 = vand.u32 2147483647, %v791
    %vm847 = vcmp.eq.f32.partialorder %v846, 8.507059e+37
    %v848 = vand.u32 %v791, 2147483648
    %v849 = vor.u32 1.1754944e-38, %v848
    %v850 = vsel %vm847, %v849, %v845
    %v851 = vmul.f32 1.0, %v850
    %v852 = vmul.f32 %v768, %v806
    %v853 = vmul.f32 %v769, %v821
    %v854 = vmul.f32 %v772, %v836
    %v855 = vmul.f32 %v773, %v851
    %v856 = vmul.f32 %v852, %v770
    %v857 = vmul.f32 %v853, %v771
    %v858 = vmul.f32 %v854, %v774
    %v859 = vmul.f32 %v855, %v775
    %vm860 = vcmp.eq.f32.partialorder %v170, 0.0
    %vm861 = vcmp.eq.f32.partialorder %v173, 0.0
    %v862 = vsel %vm860, 1.0, 0.0
    %v863 = vsel %vm861, 1.0, 0.0
    %vm864 = vcmp.eq.f32.partialorder %v196, 0.0
    %vm865 = vcmp.eq.f32.partialorder %v199, 0.0
    %v866 = vsel %vm864, %v186, 0.0
    %v867 = vsel %vm865, %v189, 0.0
    %v868 = vadd.f32 %v862, %v866
    %v869 = vadd.f32 %v863, %v867
    %v870 = vmul.f32 %v868, %v202
    %v871 = vmul.f32 %v869, %v203
    %v872 = vmul.f32 %v856, %v870
    %v873 = vmul.f32 %v857, %v870
    %v874 = vmul.f32 %v858, %v871
    %v875 = vmul.f32 %v859, %v871
    %v876 = vadd.f32 %v872, 0.0
    %v877 = vadd.f32 %v873, 0.0
    %v878 = vadd.f32 %v874, 0.0
    %v879 = vadd.f32 %v875, 0.0
    %v880 = vpack.c.bf16 %v874, %v872
    %v881 = vpack.c.bf16 %v875, %v873
    %v914 = vunpack.c.l.b16 %v269
    %v915 = vunpack.c.l.b16 %v270
    %v916 = vunpack.c.l.b16 %v271
    %v917 = vunpack.c.l.b16 %v272
    %v918 = vunpack.c.l.b16 %v273
    %v919 = vunpack.c.l.b16 %v274
    %v920 = vunpack.c.l.b16 %v275
    %v921 = vunpack.c.l.b16 %v276
    %v922 = vunpack.c.l.b16 %v277
    %v923 = vunpack.c.l.b16 %v278
    %v924 = vunpack.c.l.b16 %v279
    %v925 = vunpack.c.l.b16 %v280
    %v926 = vunpack.c.l.b16 %v281
    %v927 = vunpack.c.l.b16 %v282
    %v928 = vunpack.c.l.b16 %v283
    %v929 = vunpack.c.l.b16 %v284
    %v930 = vunpack.c.l.b16 %v285
    %v931 = vunpack.c.l.b16 %v286
    %v932 = vunpack.c.l.b16 %v287
    %v933 = vunpack.c.l.b16 %v288
    %v934 = vunpack.c.l.b16 %v289
    %v935 = vunpack.c.l.b16 %v290
    %v936 = vunpack.c.l.b16 %v291
    %v937 = vunpack.c.l.b16 %v292
    %v938 = vunpack.c.l.b16 %v293
    %v939 = vunpack.c.l.b16 %v294
    %v940 = vunpack.c.l.b16 %v295
    %v941 = vunpack.c.l.b16 %v296
    %v942 = vunpack.c.l.b16 %v297
    %v943 = vunpack.c.l.b16 %v298
    %v944 = vunpack.c.l.b16 %v299
    %v945 = vunpack.c.l.b16 %v300
    %v946 = vpack.c.b16 %v915, %v914
    %v947 = vpack.c.b16 %v917, %v916
    %v948 = vpack.c.b16 %v919, %v918
    %v949 = vpack.c.b16 %v921, %v920
    %v950 = vpack.c.b16 %v923, %v922
    %v951 = vpack.c.b16 %v925, %v924
    %v952 = vpack.c.b16 %v927, %v926
    %v953 = vpack.c.b16 %v929, %v928
    %v954 = vpack.c.b16 %v931, %v930
    %v955 = vpack.c.b16 %v933, %v932
    %v956 = vpack.c.b16 %v935, %v934
    %v957 = vpack.c.b16 %v937, %v936
    %v958 = vpack.c.b16 %v939, %v938
    %v959 = vpack.c.b16 %v941, %v940
    %v960 = vpack.c.b16 %v943, %v942
    %v961 = vpack.c.b16 %v945, %v944
    %978 = vmatpush.bf16.msra.mxu0 %v953
    %979 = vmatpush.bf16.msra.mxu0 %v952
    %980 = vmatpush.bf16.msra.mxu0 %v951
    %981 = vmatpush.bf16.msra.mxu0 %v950
    %982 = vmatpush.bf16.msra.mxu0 %v949
    %983 = vmatpush.bf16.msra.mxu0 %v948
    %984 = vmatpush.bf16.msra.mxu0 %v947
    %985 = vmatpush.bf16.msra.mxu0 %v946
    %986 = vmatmul.bf16.gmra.mxu0 %v880
    %v987 = vpop.f32.mrf.mxu0
    %v988 = vadd.f32 0.0, %v987
    %v989 = vpop.f32.mrf.mxu0
    %v990 = vadd.f32 0.0, %v989
    %991 = vdwg.mxu0
    %992 = vmatpush.bf16.msra.mxu0 %v961
    %993 = vmatpush.bf16.msra.mxu0 %v960
    %994 = vmatpush.bf16.msra.mxu0 %v959
    %995 = vmatpush.bf16.msra.mxu0 %v958
    %996 = vmatpush.bf16.msra.mxu0 %v957
    %997 = vmatpush.bf16.msra.mxu0 %v956
    %998 = vmatpush.bf16.msra.mxu0 %v955
    %999 = vmatpush.bf16.msra.mxu0 %v954
    %1000 = vmatmul.bf16.gmra.mxu0 %v881
    %v1001 = vpop.f32.mrf.mxu0
    %v1002 = vadd.f32 %v988, %v1001
    %v1003 = vpop.f32.mrf.mxu0
    %v1004 = vadd.f32 %v990, %v1003
    %1005 = vdwg.mxu0
    %vm1006 = vcmp.ge.s32.totalorder %v156, 0
    %vm1007 = vcmp.lt.s32.totalorder %v156, 32
    %vm1008 = vmand %vm1006, %vm1007
    %v1009 = vsel %vm1008, %v1002, 0.0
    %v1010 = vsel %vm1008, %v1004, 0.0
    %v1011 = vadd.f32 %v1009, 0.0
    %v1012 = vadd.f32 %v1010, 0.0
    %s1013 = scalar_lea.vmem %s4, 64
    %v1014 = vld [vmem:[%s1013] sm:$0xf]
    %v1015 = vld [vmem:[%s1013 + $0x4] sm:$0xf]
    %v1016 = vld [vmem:[%s1013 + $0x8] sm:$0xf]
    %v1017 = vld [vmem:[%s1013 + $0xc] sm:$0xf]
    %v1018 = vld [vmem:[%s1013 + $0x10] sm:$0xf]
    %v1019 = vld [vmem:[%s1013 + $0x14] sm:$0xf]
    %v1020 = vld [vmem:[%s1013 + $0x18] sm:$0xf]
    %v1021 = vld [vmem:[%s1013 + $0x1c] sm:$0xf]
    %v1022 = vld [vmem:[%s1013 + $0x20] sm:$0xf]
    %v1023 = vld [vmem:[%s1013 + $0x24] sm:$0xf]
    %v1024 = vld [vmem:[%s1013 + $0x28] sm:$0xf]
    %v1025 = vld [vmem:[%s1013 + $0x2c] sm:$0xf]
    %v1026 = vld [vmem:[%s1013 + $0x30] sm:$0xf]
    %v1027 = vld [vmem:[%s1013 + $0x34] sm:$0xf]
    %v1028 = vld [vmem:[%s1013 + $0x38] sm:$0xf]
    %v1029 = vld [vmem:[%s1013 + $0x3c] sm:$0xf]
    %v1046 = vunpack.c.l.b16 %v1014
    %v1047 = vunpack.c.l.b16 %v1015
    %v1048 = vunpack.c.l.b16 %v1016
    %v1049 = vunpack.c.l.b16 %v1017
    %v1050 = vunpack.c.l.b16 %v1018
    %v1051 = vunpack.c.l.b16 %v1019
    %v1052 = vunpack.c.l.b16 %v1020
    %v1053 = vunpack.c.l.b16 %v1021
    %v1054 = vunpack.c.l.b16 %v1022
    %v1055 = vunpack.c.l.b16 %v1023
    %v1056 = vunpack.c.l.b16 %v1024
    %v1057 = vunpack.c.l.b16 %v1025
    %v1058 = vunpack.c.l.b16 %v1026
    %v1059 = vunpack.c.l.b16 %v1027
    %v1060 = vunpack.c.l.b16 %v1028
    %v1061 = vunpack.c.l.b16 %v1029
    %v1062 = vpack.c.b16 %v1047, %v1046
    %v1063 = vpack.c.b16 %v1049, %v1048
    %v1064 = vpack.c.b16 %v1051, %v1050
    %v1065 = vpack.c.b16 %v1053, %v1052
    %v1066 = vpack.c.b16 %v1055, %v1054
    %v1067 = vpack.c.b16 %v1057, %v1056
    %v1068 = vpack.c.b16 %v1059, %v1058
    %v1069 = vpack.c.b16 %v1061, %v1060
    %1078 = vmatpush.bf16.msra.mxu0 %v1069
    %1079 = vmatpush.bf16.msra.mxu0 %v1068
    %1080 = vmatpush.bf16.msra.mxu0 %v1067
    %1081 = vmatpush.bf16.msra.mxu0 %v1066
    %1082 = vmatpush.bf16.msra.mxu0 %v1065
    %1083 = vmatpush.bf16.msra.mxu0 %v1064
    %1084 = vmatpush.bf16.msra.mxu0 %v1063
    %1085 = vmatpush.bf16.msra.mxu0 %v1062
    %1086 = vmatmul.bf16.gmra.mxu0 %v204
    %v1087 = vpop.f32.mrf.mxu0
    %v1088 = vadd.f32 0.0, %v1087
    %v1089 = vpop.f32.mrf.mxu0
    %v1090 = vadd.f32 0.0, %v1089
    %1091 = vdwg.mxu0
    %v1092 = vpack.c.bf16 %v1090, %v1088
    %s1093 = scalar_lea.vmem %s5, 128
    %v1094 = vld [vmem:[%s1093] sm:$0xff]
    %v1095 = vld [vmem:[%s1093 + $0x8] sm:$0xff]
    %v1096 = vld [vmem:[%s1093 + $0x10] sm:$0xff]
    %v1097 = vld [vmem:[%s1093 + $0x18] sm:$0xff]
    %v1098 = vld [vmem:[%s1093 + $0x20] sm:$0xff]
    %v1099 = vld [vmem:[%s1093 + $0x28] sm:$0xff]
    %v1100 = vld [vmem:[%s1093 + $0x30] sm:$0xff]
    %v1101 = vld [vmem:[%s1093 + $0x38] sm:$0xff]
    %v1102 = vld [vmem:[%s1093 + $0x40] sm:$0xff]
    %v1103 = vld [vmem:[%s1093 + $0x48] sm:$0xff]
    %v1104 = vld [vmem:[%s1093 + $0x50] sm:$0xff]
    %v1105 = vld [vmem:[%s1093 + $0x58] sm:$0xff]
    %v1106 = vld [vmem:[%s1093 + $0x60] sm:$0xff]
    %v1107 = vld [vmem:[%s1093 + $0x68] sm:$0xff]
    %v1108 = vld [vmem:[%s1093 + $0x70] sm:$0xff]
    %v1109 = vld [vmem:[%s1093 + $0x78] sm:$0xff]
    %v1126 = vunpack.c.l.b16 %v1094
    %v1127 = vunpack.c.h.b16 %v1094
    %v1128 = vunpack.c.l.b16 %v1095
    %v1129 = vunpack.c.h.b16 %v1095
    %v1130 = vunpack.c.l.b16 %v1096
    %v1131 = vunpack.c.h.b16 %v1096
    %v1132 = vunpack.c.l.b16 %v1097
    %v1133 = vunpack.c.h.b16 %v1097
    %v1134 = vunpack.c.l.b16 %v1098
    %v1135 = vunpack.c.h.b16 %v1098
    %v1136 = vunpack.c.l.b16 %v1099
    %v1137 = vunpack.c.h.b16 %v1099
    %v1138 = vunpack.c.l.b16 %v1100
    %v1139 = vunpack.c.h.b16 %v1100
    %v1140 = vunpack.c.l.b16 %v1101
    %v1141 = vunpack.c.h.b16 %v1101
    %v1142 = vunpack.c.l.b16 %v1102
    %v1143 = vunpack.c.h.b16 %v1102
    %v1144 = vunpack.c.l.b16 %v1103
    %v1145 = vunpack.c.h.b16 %v1103
    %v1146 = vunpack.c.l.b16 %v1104
    %v1147 = vunpack.c.h.b16 %v1104
    %v1148 = vunpack.c.l.b16 %v1105
    %v1149 = vunpack.c.h.b16 %v1105
    %v1150 = vunpack.c.l.b16 %v1106
    %v1151 = vunpack.c.h.b16 %v1106
    %v1152 = vunpack.c.l.b16 %v1107
    %v1153 = vunpack.c.h.b16 %v1107
    %v1154 = vunpack.c.l.b16 %v1108
    %v1155 = vunpack.c.h.b16 %v1108
    %v1156 = vunpack.c.l.b16 %v1109
    %v1157 = vunpack.c.h.b16 %v1109
    %v1158 = vpack.c.b16 %v1130, %v1126
    %v1159 = vpack.c.b16 %v1131, %v1127
    %v1160 = vpack.c.b16 %v1132, %v1128
    %v1161 = vpack.c.b16 %v1133, %v1129
    %v1162 = vpack.c.b16 %v1138, %v1134
    %v1163 = vpack.c.b16 %v1139, %v1135
    %v1164 = vpack.c.b16 %v1140, %v1136
    %v1165 = vpack.c.b16 %v1141, %v1137
    %v1166 = vpack.c.b16 %v1146, %v1142
    %v1167 = vpack.c.b16 %v1147, %v1143
    %v1168 = vpack.c.b16 %v1148, %v1144
    %v1169 = vpack.c.b16 %v1149, %v1145
    %v1170 = vpack.c.b16 %v1154, %v1150
    %v1171 = vpack.c.b16 %v1155, %v1151
    %v1172 = vpack.c.b16 %v1156, %v1152
    %v1173 = vpack.c.b16 %v1157, %v1153
    %v1191 = vsel %vm708, %v1092, 0
    %1193 = vmatpush.bf16.msra.mxu0 0
    %1194 = vmatpush.bf16.msra.mxu0 0
    %1195 = vmatpush.bf16.msra.mxu0 0
    %1196 = vmatpush.bf16.msra.mxu0 0
    %1197 = vmatpush.bf16.msra.mxu0 %v1170
    %1198 = vmatpush.bf16.msra.mxu0 %v1166
    %1199 = vmatpush.bf16.msra.mxu0 %v1162
    %1200 = vmatpush.bf16.msra.mxu0 %v1158
    %1201 = vmatmul.bf16.gmra.mxu0 %v1191
    %v1202 = vpop.f32.mrf.mxu0
    %v1203 = vadd.f32 0.0, %v1202
    %v1204 = vpop.f32.mrf.mxu0
    %v1205 = vadd.f32 0.0, %v1204
    %1206 = vdwg.mxu0
    %1207 = vmatpush.bf16.msra.mxu0 0
    %1208 = vmatpush.bf16.msra.mxu0 0
    %1209 = vmatpush.bf16.msra.mxu0 0
    %1210 = vmatpush.bf16.msra.mxu0 0
    %1211 = vmatpush.bf16.msra.mxu0 %v1171
    %1212 = vmatpush.bf16.msra.mxu0 %v1167
    %1213 = vmatpush.bf16.msra.mxu0 %v1163
    %1214 = vmatpush.bf16.msra.mxu0 %v1159
    %1215 = vmatmul.bf16.gmra.mxu0 %v1191
    %v1216 = vpop.f32.mrf.mxu0
    %v1217 = vadd.f32 0.0, %v1216
    %v1218 = vpop.f32.mrf.mxu0
    %v1219 = vadd.f32 0.0, %v1218
    %1220 = vdwg.mxu0
    %1221 = vmatpush.bf16.msra.mxu0 0
    %1222 = vmatpush.bf16.msra.mxu0 0
    %1223 = vmatpush.bf16.msra.mxu0 0
    %1224 = vmatpush.bf16.msra.mxu0 0
    %1225 = vmatpush.bf16.msra.mxu0 %v1172
    %1226 = vmatpush.bf16.msra.mxu0 %v1168
    %1227 = vmatpush.bf16.msra.mxu0 %v1164
    %1228 = vmatpush.bf16.msra.mxu0 %v1160
    %1229 = vmatmul.bf16.gmra.mxu0 %v1191
    %v1230 = vpop.f32.mrf.mxu0
    %v1231 = vadd.f32 0.0, %v1230
    %v1232 = vpop.f32.mrf.mxu0
    %v1233 = vadd.f32 0.0, %v1232
    %1234 = vdwg.mxu0
    %1235 = vmatpush.bf16.msra.mxu0 0
    %1236 = vmatpush.bf16.msra.mxu0 0
    %1237 = vmatpush.bf16.msra.mxu0 0
    %1238 = vmatpush.bf16.msra.mxu0 0
    %1239 = vmatpush.bf16.msra.mxu0 %v1173
    %1240 = vmatpush.bf16.msra.mxu0 %v1169
    %1241 = vmatpush.bf16.msra.mxu0 %v1165
    %1242 = vmatpush.bf16.msra.mxu0 %v1161
    %1243 = vmatmul.bf16.gmra.mxu0 %v1191
    %v1244 = vpop.f32.mrf.mxu0
    %v1245 = vadd.f32 0.0, %v1244
    %v1246 = vpop.f32.mrf.mxu0
    %v1247 = vadd.f32 0.0, %v1246
    %1248 = vdwg.mxu0
    %v1249 = vadd.f32 %v487, %v1203
    %v1250 = vadd.f32 %v501, %v1217
    %v1251 = vadd.f32 %v515, %v1231
    %v1252 = vadd.f32 %v529, %v1245
    %v1253 = vadd.f32 %v489, %v1205
    %v1254 = vadd.f32 %v503, %v1219
    %v1255 = vadd.f32 %v517, %v1233
    %v1256 = vadd.f32 %v531, %v1247
    %v1257 = vxor.u32 %v1249, 2147483648
    %v1258 = vxor.u32 %v1250, 2147483648
    %v1259 = vxor.u32 %v1253, 2147483648
    %v1260 = vxor.u32 %v1254, 2147483648
    %v1261 = vmul.f32 %v1257, 1.442695
    %v1262 = vpow.pop %v1261
    %v1263 = vmul.f32 %v1258, 1.442695
    %v1264 = vpow.pop %v1263
    %v1265 = vmul.f32 %v1259, 1.442695
    %v1266 = vpow.pop %v1265
    %v1267 = vmul.f32 %v1260, 1.442695
    %v1268 = vpow.pop %v1267
    %v1269 = vadd.f32 %v1262, 1.0
    %v1270 = vadd.f32 %v1264, 1.0
    %v1271 = vadd.f32 %v1266, 1.0
    %v1272 = vadd.f32 %v1268, 1.0
    %v1273 = vrcp.pop %v1269
    %v1274 = vmul.f32 %v1269, %v1273
    %v1275 = vsub.f32 1.0, %v1274
    %v1276 = vmul.f32 %v1273, %v1275
    %v1277 = vadd.f32 %v1273, %v1276
    %vm1278 = vweird.f32 %v1269
    %vm1279 = vweird.f32 %v1273
    %vm1280 = vmor %vm1278, %vm1279
    %v1281 = vsel %vm1280, %v1273, %v1277
    %v1282 = vand.u32 2147483647, %v1269
    %vm1283 = vcmp.eq.f32.partialorder %v1282, 8.507059e+37
    %v1284 = vand.u32 %v1269, 2147483648
    %v1285 = vor.u32 1.1754944e-38, %v1284
    %v1286 = vsel %vm1283, %v1285, %v1281
    %v1287 = vmul.f32 1.0, %v1286
    %v1288 = vrcp.pop %v1270
    %v1289 = vmul.f32 %v1270, %v1288
    %v1290 = vsub.f32 1.0, %v1289
    %v1291 = vmul.f32 %v1288, %v1290
    %v1292 = vadd.f32 %v1288, %v1291
    %vm1293 = vweird.f32 %v1270
    %vm1294 = vweird.f32 %v1288
    %vm1295 = vmor %vm1293, %vm1294
    %v1296 = vsel %vm1295, %v1288, %v1292
    %v1297 = vand.u32 2147483647, %v1270
    %vm1298 = vcmp.eq.f32.partialorder %v1297, 8.507059e+37
    %v1299 = vand.u32 %v1270, 2147483648
    %v1300 = vor.u32 1.1754944e-38, %v1299
    %v1301 = vsel %vm1298, %v1300, %v1296
    %v1302 = vmul.f32 1.0, %v1301
    %v1303 = vrcp.pop %v1271
    %v1304 = vmul.f32 %v1271, %v1303
    %v1305 = vsub.f32 1.0, %v1304
    %v1306 = vmul.f32 %v1303, %v1305
    %v1307 = vadd.f32 %v1303, %v1306
    %vm1308 = vweird.f32 %v1271
    %vm1309 = vweird.f32 %v1303
    %vm1310 = vmor %vm1308, %vm1309
    %v1311 = vsel %vm1310, %v1303, %v1307
    %v1312 = vand.u32 2147483647, %v1271
    %vm1313 = vcmp.eq.f32.partialorder %v1312, 8.507059e+37
    %v1314 = vand.u32 %v1271, 2147483648
    %v1315 = vor.u32 1.1754944e-38, %v1314
    %v1316 = vsel %vm1313, %v1315, %v1311
    %v1317 = vmul.f32 1.0, %v1316
    %v1318 = vrcp.pop %v1272
    %v1319 = vmul.f32 %v1272, %v1318
    %v1320 = vsub.f32 1.0, %v1319
    %v1321 = vmul.f32 %v1318, %v1320
    %v1322 = vadd.f32 %v1318, %v1321
    %vm1323 = vweird.f32 %v1272
    %vm1324 = vweird.f32 %v1318
    %vm1325 = vmor %vm1323, %vm1324
    %v1326 = vsel %vm1325, %v1318, %v1322
    %v1327 = vand.u32 2147483647, %v1272
    %vm1328 = vcmp.eq.f32.partialorder %v1327, 8.507059e+37
    %v1329 = vand.u32 %v1272, 2147483648
    %v1330 = vor.u32 1.1754944e-38, %v1329
    %v1331 = vsel %vm1328, %v1330, %v1326
    %v1332 = vmul.f32 1.0, %v1331
    %v1333 = vmul.f32 %v1249, %v1287
    %v1334 = vmul.f32 %v1250, %v1302
    %v1335 = vmul.f32 %v1253, %v1317
    %v1336 = vmul.f32 %v1254, %v1332
    %v1337 = vmul.f32 %v1333, %v1251
    %v1338 = vmul.f32 %v1334, %v1252
    %v1339 = vmul.f32 %v1335, %v1255
    %v1340 = vmul.f32 %v1336, %v1256
    %vm1341 = vcmp.eq.f32.partialorder %v170, 1.0
    %vm1342 = vcmp.eq.f32.partialorder %v173, 1.0
    %v1343 = vsel %vm1341, 1.0, 0.0
    %v1344 = vsel %vm1342, 1.0, 0.0
    %vm1345 = vcmp.eq.f32.partialorder %v196, 1.0
    %vm1346 = vcmp.eq.f32.partialorder %v199, 1.0
    %v1347 = vsel %vm1345, %v186, 0.0
    %v1348 = vsel %vm1346, %v189, 0.0
    %v1349 = vadd.f32 %v1343, %v1347
    %v1350 = vadd.f32 %v1344, %v1348
    %v1351 = vmul.f32 %v1349, %v202
    %v1352 = vmul.f32 %v1350, %v203
    %v1353 = vmul.f32 %v1337, %v1351
    %v1354 = vmul.f32 %v1338, %v1351
    %v1355 = vmul.f32 %v1339, %v1352
    %v1356 = vmul.f32 %v1340, %v1352
    %v1357 = vadd.f32 %v876, %v1353
    %v1358 = vadd.f32 %v877, %v1354
    %v1359 = vadd.f32 %v878, %v1355
    %v1360 = vadd.f32 %v879, %v1356
    %v1361 = vpack.c.bf16 %v1355, %v1353
    %v1362 = vpack.c.bf16 %v1356, %v1354
    %1363 = vmatpush.bf16.msra.mxu0 %v953
    %1364 = vmatpush.bf16.msra.mxu0 %v952
    %1365 = vmatpush.bf16.msra.mxu0 %v951
    %1366 = vmatpush.bf16.msra.mxu0 %v950
    %1367 = vmatpush.bf16.msra.mxu0 %v949
    %1368 = vmatpush.bf16.msra.mxu0 %v948
    %1369 = vmatpush.bf16.msra.mxu0 %v947
    %1370 = vmatpush.bf16.msra.mxu0 %v946
    %1371 = vmatmul.bf16.gmra.mxu0 %v1361
    %v1372 = vpop.f32.mrf.mxu0
    %v1373 = vadd.f32 0.0, %v1372
    %v1374 = vpop.f32.mrf.mxu0
    %v1375 = vadd.f32 0.0, %v1374
    %1376 = vdwg.mxu0
    %1377 = vmatpush.bf16.msra.mxu0 %v961
    %1378 = vmatpush.bf16.msra.mxu0 %v960
    %1379 = vmatpush.bf16.msra.mxu0 %v959
    %1380 = vmatpush.bf16.msra.mxu0 %v958
    %1381 = vmatpush.bf16.msra.mxu0 %v957
    %1382 = vmatpush.bf16.msra.mxu0 %v956
    %1383 = vmatpush.bf16.msra.mxu0 %v955
    %1384 = vmatpush.bf16.msra.mxu0 %v954
    %1385 = vmatmul.bf16.gmra.mxu0 %v1362
    %v1386 = vpop.f32.mrf.mxu0
    %v1387 = vadd.f32 %v1373, %v1386
    %v1388 = vpop.f32.mrf.mxu0
    %v1389 = vadd.f32 %v1375, %v1388
    %1390 = vdwg.mxu0
    %vm1391 = vcmp.ge.s32.totalorder %v156, 32
    %vm1392 = vcmp.lt.s32.totalorder %v156, 64
    %vm1393 = vmand %vm1391, %vm1392
    %v1394 = vsel %vm1393, %v1387, 0.0
    %v1395 = vsel %vm1393, %v1389, 0.0
    %v1396 = vadd.f32 %v1011, %v1394
    %v1397 = vadd.f32 %v1012, %v1395
    %s1398 = scalar_lea.vmem %s4, 128
    %v1399 = vld [vmem:[%s1398] sm:$0xf]
    %v1400 = vld [vmem:[%s1398 + $0x4] sm:$0xf]
    %v1401 = vld [vmem:[%s1398 + $0x8] sm:$0xf]
    %v1402 = vld [vmem:[%s1398 + $0xc] sm:$0xf]
    %v1403 = vld [vmem:[%s1398 + $0x10] sm:$0xf]
    %v1404 = vld [vmem:[%s1398 + $0x14] sm:$0xf]
    %v1405 = vld [vmem:[%s1398 + $0x18] sm:$0xf]
    %v1406 = vld [vmem:[%s1398 + $0x1c] sm:$0xf]
    %v1407 = vld [vmem:[%s1398 + $0x20] sm:$0xf]
    %v1408 = vld [vmem:[%s1398 + $0x24] sm:$0xf]
    %v1409 = vld [vmem:[%s1398 + $0x28] sm:$0xf]
    %v1410 = vld [vmem:[%s1398 + $0x2c] sm:$0xf]
    %v1411 = vld [vmem:[%s1398 + $0x30] sm:$0xf]
    %v1412 = vld [vmem:[%s1398 + $0x34] sm:$0xf]
    %v1413 = vld [vmem:[%s1398 + $0x38] sm:$0xf]
    %v1414 = vld [vmem:[%s1398 + $0x3c] sm:$0xf]
    %v1431 = vunpack.c.l.b16 %v1399
    %v1432 = vunpack.c.l.b16 %v1400
    %v1433 = vunpack.c.l.b16 %v1401
    %v1434 = vunpack.c.l.b16 %v1402
    %v1435 = vunpack.c.l.b16 %v1403
    %v1436 = vunpack.c.l.b16 %v1404
    %v1437 = vunpack.c.l.b16 %v1405
    %v1438 = vunpack.c.l.b16 %v1406
    %v1439 = vunpack.c.l.b16 %v1407
    %v1440 = vunpack.c.l.b16 %v1408
    %v1441 = vunpack.c.l.b16 %v1409
    %v1442 = vunpack.c.l.b16 %v1410
    %v1443 = vunpack.c.l.b16 %v1411
    %v1444 = vunpack.c.l.b16 %v1412
    %v1445 = vunpack.c.l.b16 %v1413
    %v1446 = vunpack.c.l.b16 %v1414
    %v1447 = vpack.c.b16 %v1432, %v1431
    %v1448 = vpack.c.b16 %v1434, %v1433
    %v1449 = vpack.c.b16 %v1436, %v1435
    %v1450 = vpack.c.b16 %v1438, %v1437
    %v1451 = vpack.c.b16 %v1440, %v1439
    %v1452 = vpack.c.b16 %v1442, %v1441
    %v1453 = vpack.c.b16 %v1444, %v1443
    %v1454 = vpack.c.b16 %v1446, %v1445
    %1463 = vmatpush.bf16.msra.mxu0 %v1454
    %1464 = vmatpush.bf16.msra.mxu0 %v1453
    %1465 = vmatpush.bf16.msra.mxu0 %v1452
    %1466 = vmatpush.bf16.msra.mxu0 %v1451
    %1467 = vmatpush.bf16.msra.mxu0 %v1450
    %1468 = vmatpush.bf16.msra.mxu0 %v1449
    %1469 = vmatpush.bf16.msra.mxu0 %v1448
    %1470 = vmatpush.bf16.msra.mxu0 %v1447
    %1471 = vmatmul.bf16.gmra.mxu0 %v204
    %v1472 = vpop.f32.mrf.mxu0
    %v1473 = vadd.f32 0.0, %v1472
    %v1474 = vpop.f32.mrf.mxu0
    %v1475 = vadd.f32 0.0, %v1474
    %1476 = vdwg.mxu0
    %v1477 = vpack.c.bf16 %v1475, %v1473
    %s1478 = scalar_lea.vmem %s5, 256
    %v1479 = vld [vmem:[%s1478] sm:$0xff]
    %v1480 = vld [vmem:[%s1478 + $0x8] sm:$0xff]
    %v1481 = vld [vmem:[%s1478 + $0x10] sm:$0xff]
    %v1482 = vld [vmem:[%s1478 + $0x18] sm:$0xff]
    %v1483 = vld [vmem:[%s1478 + $0x20] sm:$0xff]
    %v1484 = vld [vmem:[%s1478 + $0x28] sm:$0xff]
    %v1485 = vld [vmem:[%s1478 + $0x30] sm:$0xff]
    %v1486 = vld [vmem:[%s1478 + $0x38] sm:$0xff]
    %v1487 = vld [vmem:[%s1478 + $0x40] sm:$0xff]
    %v1488 = vld [vmem:[%s1478 + $0x48] sm:$0xff]
    %v1489 = vld [vmem:[%s1478 + $0x50] sm:$0xff]
    %v1490 = vld [vmem:[%s1478 + $0x58] sm:$0xff]
    %v1491 = vld [vmem:[%s1478 + $0x60] sm:$0xff]
    %v1492 = vld [vmem:[%s1478 + $0x68] sm:$0xff]
    %v1493 = vld [vmem:[%s1478 + $0x70] sm:$0xff]
    %v1494 = vld [vmem:[%s1478 + $0x78] sm:$0xff]
    %v1511 = vunpack.c.l.b16 %v1479
    %v1512 = vunpack.c.h.b16 %v1479
    %v1513 = vunpack.c.l.b16 %v1480
    %v1514 = vunpack.c.h.b16 %v1480
    %v1515 = vunpack.c.l.b16 %v1481
    %v1516 = vunpack.c.h.b16 %v1481
    %v1517 = vunpack.c.l.b16 %v1482
    %v1518 = vunpack.c.h.b16 %v1482
    %v1519 = vunpack.c.l.b16 %v1483
    %v1520 = vunpack.c.h.b16 %v1483
    %v1521 = vunpack.c.l.b16 %v1484
    %v1522 = vunpack.c.h.b16 %v1484
    %v1523 = vunpack.c.l.b16 %v1485
    %v1524 = vunpack.c.h.b16 %v1485
    %v1525 = vunpack.c.l.b16 %v1486
    %v1526 = vunpack.c.h.b16 %v1486
    %v1527 = vunpack.c.l.b16 %v1487
    %v1528 = vunpack.c.h.b16 %v1487
    %v1529 = vunpack.c.l.b16 %v1488
    %v1530 = vunpack.c.h.b16 %v1488
    %v1531 = vunpack.c.l.b16 %v1489
    %v1532 = vunpack.c.h.b16 %v1489
    %v1533 = vunpack.c.l.b16 %v1490
    %v1534 = vunpack.c.h.b16 %v1490
    %v1535 = vunpack.c.l.b16 %v1491
    %v1536 = vunpack.c.h.b16 %v1491
    %v1537 = vunpack.c.l.b16 %v1492
    %v1538 = vunpack.c.h.b16 %v1492
    %v1539 = vunpack.c.l.b16 %v1493
    %v1540 = vunpack.c.h.b16 %v1493
    %v1541 = vunpack.c.l.b16 %v1494
    %v1542 = vunpack.c.h.b16 %v1494
    %v1543 = vpack.c.b16 %v1515, %v1511
    %v1544 = vpack.c.b16 %v1516, %v1512
    %v1545 = vpack.c.b16 %v1517, %v1513
    %v1546 = vpack.c.b16 %v1518, %v1514
    %v1547 = vpack.c.b16 %v1523, %v1519
    %v1548 = vpack.c.b16 %v1524, %v1520
    %v1549 = vpack.c.b16 %v1525, %v1521
    %v1550 = vpack.c.b16 %v1526, %v1522
    %v1551 = vpack.c.b16 %v1531, %v1527
    %v1552 = vpack.c.b16 %v1532, %v1528
    %v1553 = vpack.c.b16 %v1533, %v1529
    %v1554 = vpack.c.b16 %v1534, %v1530
    %v1555 = vpack.c.b16 %v1539, %v1535
    %v1556 = vpack.c.b16 %v1540, %v1536
    %v1557 = vpack.c.b16 %v1541, %v1537
    %v1558 = vpack.c.b16 %v1542, %v1538
    %v1576 = vsel %vm708, %v1477, 0
    %1578 = vmatpush.bf16.msra.mxu0 0
    %1579 = vmatpush.bf16.msra.mxu0 0
    %1580 = vmatpush.bf16.msra.mxu0 0
    %1581 = vmatpush.bf16.msra.mxu0 0
    %1582 = vmatpush.bf16.msra.mxu0 %v1555
    %1583 = vmatpush.bf16.msra.mxu0 %v1551
    %1584 = vmatpush.bf16.msra.mxu0 %v1547
    %1585 = vmatpush.bf16.msra.mxu0 %v1543
    %1586 = vmatmul.bf16.gmra.mxu0 %v1576
    %v1587 = vpop.f32.mrf.mxu0
    %v1588 = vadd.f32 0.0, %v1587
    %v1589 = vpop.f32.mrf.mxu0
    %v1590 = vadd.f32 0.0, %v1589
    %1591 = vdwg.mxu0
    %1592 = vmatpush.bf16.msra.mxu0 0
    %1593 = vmatpush.bf16.msra.mxu0 0
    %1594 = vmatpush.bf16.msra.mxu0 0
    %1595 = vmatpush.bf16.msra.mxu0 0
    %1596 = vmatpush.bf16.msra.mxu0 %v1556
    %1597 = vmatpush.bf16.msra.mxu0 %v1552
    %1598 = vmatpush.bf16.msra.mxu0 %v1548
    %1599 = vmatpush.bf16.msra.mxu0 %v1544
    %1600 = vmatmul.bf16.gmra.mxu0 %v1576
    %v1601 = vpop.f32.mrf.mxu0
    %v1602 = vadd.f32 0.0, %v1601
    %v1603 = vpop.f32.mrf.mxu0
    %v1604 = vadd.f32 0.0, %v1603
    %1605 = vdwg.mxu0
    %1606 = vmatpush.bf16.msra.mxu0 0
    %1607 = vmatpush.bf16.msra.mxu0 0
    %1608 = vmatpush.bf16.msra.mxu0 0
    %1609 = vmatpush.bf16.msra.mxu0 0
    %1610 = vmatpush.bf16.msra.mxu0 %v1557
    %1611 = vmatpush.bf16.msra.mxu0 %v1553
    %1612 = vmatpush.bf16.msra.mxu0 %v1549
    %1613 = vmatpush.bf16.msra.mxu0 %v1545
    %1614 = vmatmul.bf16.gmra.mxu0 %v1576
    %v1615 = vpop.f32.mrf.mxu0
    %v1616 = vadd.f32 0.0, %v1615
    %v1617 = vpop.f32.mrf.mxu0
    %v1618 = vadd.f32 0.0, %v1617
    %1619 = vdwg.mxu0
    %1620 = vmatpush.bf16.msra.mxu0 0
    %1621 = vmatpush.bf16.msra.mxu0 0
    %1622 = vmatpush.bf16.msra.mxu0 0
    %1623 = vmatpush.bf16.msra.mxu0 0
    %1624 = vmatpush.bf16.msra.mxu0 %v1558
    %1625 = vmatpush.bf16.msra.mxu0 %v1554
    %1626 = vmatpush.bf16.msra.mxu0 %v1550
    %1627 = vmatpush.bf16.msra.mxu0 %v1546
    %1628 = vmatmul.bf16.gmra.mxu0 %v1576
    %v1629 = vpop.f32.mrf.mxu0
    %v1630 = vadd.f32 0.0, %v1629
    %v1631 = vpop.f32.mrf.mxu0
    %v1632 = vadd.f32 0.0, %v1631
    %1633 = vdwg.mxu0
    %v1634 = vadd.f32 %v487, %v1588
    %v1635 = vadd.f32 %v501, %v1602
    %v1636 = vadd.f32 %v515, %v1616
    %v1637 = vadd.f32 %v529, %v1630
    %v1638 = vadd.f32 %v489, %v1590
    %v1639 = vadd.f32 %v503, %v1604
    %v1640 = vadd.f32 %v517, %v1618
    %v1641 = vadd.f32 %v531, %v1632
    %v1642 = vxor.u32 %v1634, 2147483648
    %v1643 = vxor.u32 %v1635, 2147483648
    %v1644 = vxor.u32 %v1638, 2147483648
    %v1645 = vxor.u32 %v1639, 2147483648
    %v1646 = vmul.f32 %v1642, 1.442695
    %v1647 = vpow.pop %v1646
    %v1648 = vmul.f32 %v1643, 1.442695
    %v1649 = vpow.pop %v1648
    %v1650 = vmul.f32 %v1644, 1.442695
    %v1651 = vpow.pop %v1650
    %v1652 = vmul.f32 %v1645, 1.442695
    %v1653 = vpow.pop %v1652
    %v1654 = vadd.f32 %v1647, 1.0
    %v1655 = vadd.f32 %v1649, 1.0
    %v1656 = vadd.f32 %v1651, 1.0
    %v1657 = vadd.f32 %v1653, 1.0
    %v1658 = vrcp.pop %v1654
    %v1659 = vmul.f32 %v1654, %v1658
    %v1660 = vsub.f32 1.0, %v1659
    %v1661 = vmul.f32 %v1658, %v1660
    %v1662 = vadd.f32 %v1658, %v1661
    %vm1663 = vweird.f32 %v1654
    %vm1664 = vweird.f32 %v1658
    %vm1665 = vmor %vm1663, %vm1664
    %v1666 = vsel %vm1665, %v1658, %v1662
    %v1667 = vand.u32 2147483647, %v1654
    %vm1668 = vcmp.eq.f32.partialorder %v1667, 8.507059e+37
    %v1669 = vand.u32 %v1654, 2147483648
    %v1670 = vor.u32 1.1754944e-38, %v1669
    %v1671 = vsel %vm1668, %v1670, %v1666
    %v1672 = vmul.f32 1.0, %v1671
    %v1673 = vrcp.pop %v1655
    %v1674 = vmul.f32 %v1655, %v1673
    %v1675 = vsub.f32 1.0, %v1674
    %v1676 = vmul.f32 %v1673, %v1675
    %v1677 = vadd.f32 %v1673, %v1676
    %vm1678 = vweird.f32 %v1655
    %vm1679 = vweird.f32 %v1673
    %vm1680 = vmor %vm1678, %vm1679
    %v1681 = vsel %vm1680, %v1673, %v1677
    %v1682 = vand.u32 2147483647, %v1655
    %vm1683 = vcmp.eq.f32.partialorder %v1682, 8.507059e+37
    %v1684 = vand.u32 %v1655, 2147483648
    %v1685 = vor.u32 1.1754944e-38, %v1684
    %v1686 = vsel %vm1683, %v1685, %v1681
    %v1687 = vmul.f32 1.0, %v1686
    %v1688 = vrcp.pop %v1656
    %v1689 = vmul.f32 %v1656, %v1688
    %v1690 = vsub.f32 1.0, %v1689
    %v1691 = vmul.f32 %v1688, %v1690
    %v1692 = vadd.f32 %v1688, %v1691
    %vm1693 = vweird.f32 %v1656
    %vm1694 = vweird.f32 %v1688
    %vm1695 = vmor %vm1693, %vm1694
    %v1696 = vsel %vm1695, %v1688, %v1692
    %v1697 = vand.u32 2147483647, %v1656
    %vm1698 = vcmp.eq.f32.partialorder %v1697, 8.507059e+37
    %v1699 = vand.u32 %v1656, 2147483648
    %v1700 = vor.u32 1.1754944e-38, %v1699
    %v1701 = vsel %vm1698, %v1700, %v1696
    %v1702 = vmul.f32 1.0, %v1701
    %v1703 = vrcp.pop %v1657
    %v1704 = vmul.f32 %v1657, %v1703
    %v1705 = vsub.f32 1.0, %v1704
    %v1706 = vmul.f32 %v1703, %v1705
    %v1707 = vadd.f32 %v1703, %v1706
    %vm1708 = vweird.f32 %v1657
    %vm1709 = vweird.f32 %v1703
    %vm1710 = vmor %vm1708, %vm1709
    %v1711 = vsel %vm1710, %v1703, %v1707
    %v1712 = vand.u32 2147483647, %v1657
    %vm1713 = vcmp.eq.f32.partialorder %v1712, 8.507059e+37
    %v1714 = vand.u32 %v1657, 2147483648
    %v1715 = vor.u32 1.1754944e-38, %v1714
    %v1716 = vsel %vm1713, %v1715, %v1711
    %v1717 = vmul.f32 1.0, %v1716
    %v1718 = vmul.f32 %v1634, %v1672
    %v1719 = vmul.f32 %v1635, %v1687
    %v1720 = vmul.f32 %v1638, %v1702
    %v1721 = vmul.f32 %v1639, %v1717
    %v1722 = vmul.f32 %v1718, %v1636
    %v1723 = vmul.f32 %v1719, %v1637
    %v1724 = vmul.f32 %v1720, %v1640
    %v1725 = vmul.f32 %v1721, %v1641
    %vm1726 = vcmp.eq.f32.partialorder %v170, 2.0
    %vm1727 = vcmp.eq.f32.partialorder %v173, 2.0
    %v1728 = vsel %vm1726, 1.0, 0.0
    %v1729 = vsel %vm1727, 1.0, 0.0
    %vm1730 = vcmp.eq.f32.partialorder %v196, 2.0
    %vm1731 = vcmp.eq.f32.partialorder %v199, 2.0
    %v1732 = vsel %vm1730, %v186, 0.0
    %v1733 = vsel %vm1731, %v189, 0.0
    %v1734 = vadd.f32 %v1728, %v1732
    %v1735 = vadd.f32 %v1729, %v1733
    %v1736 = vmul.f32 %v1734, %v202
    %v1737 = vmul.f32 %v1735, %v203
    %v1738 = vmul.f32 %v1722, %v1736
    %v1739 = vmul.f32 %v1723, %v1736
    %v1740 = vmul.f32 %v1724, %v1737
    %v1741 = vmul.f32 %v1725, %v1737
    %v1742 = vadd.f32 %v1357, %v1738
    %v1743 = vadd.f32 %v1358, %v1739
    %v1744 = vadd.f32 %v1359, %v1740
    %v1745 = vadd.f32 %v1360, %v1741
    %v1746 = vpack.c.bf16 %v1740, %v1738
    %v1747 = vpack.c.bf16 %v1741, %v1739
    %1748 = vmatpush.bf16.msra.mxu0 %v953
    %1749 = vmatpush.bf16.msra.mxu0 %v952
    %1750 = vmatpush.bf16.msra.mxu0 %v951
    %1751 = vmatpush.bf16.msra.mxu0 %v950
    %1752 = vmatpush.bf16.msra.mxu0 %v949
    %1753 = vmatpush.bf16.msra.mxu0 %v948
    %1754 = vmatpush.bf16.msra.mxu0 %v947
    %1755 = vmatpush.bf16.msra.mxu0 %v946
    %1756 = vmatmul.bf16.gmra.mxu0 %v1746
    %v1757 = vpop.f32.mrf.mxu0
    %v1758 = vadd.f32 0.0, %v1757
    %v1759 = vpop.f32.mrf.mxu0
    %v1760 = vadd.f32 0.0, %v1759
    %1761 = vdwg.mxu0
    %1762 = vmatpush.bf16.msra.mxu0 %v961
    %1763 = vmatpush.bf16.msra.mxu0 %v960
    %1764 = vmatpush.bf16.msra.mxu0 %v959
    %1765 = vmatpush.bf16.msra.mxu0 %v958
    %1766 = vmatpush.bf16.msra.mxu0 %v957
    %1767 = vmatpush.bf16.msra.mxu0 %v956
    %1768 = vmatpush.bf16.msra.mxu0 %v955
    %1769 = vmatpush.bf16.msra.mxu0 %v954
    %1770 = vmatmul.bf16.gmra.mxu0 %v1747
    %v1771 = vpop.f32.mrf.mxu0
    %v1772 = vadd.f32 %v1758, %v1771
    %v1773 = vpop.f32.mrf.mxu0
    %v1774 = vadd.f32 %v1760, %v1773
    %1775 = vdwg.mxu0
    %vm1776 = vcmp.ge.s32.totalorder %v156, 64
    %vm1777 = vcmp.lt.s32.totalorder %v156, 96
    %vm1778 = vmand %vm1776, %vm1777
    %v1779 = vsel %vm1778, %v1772, 0.0
    %v1780 = vsel %vm1778, %v1774, 0.0
    %v1781 = vadd.f32 %v1396, %v1779
    %v1782 = vadd.f32 %v1397, %v1780
    %s1783 = scalar_lea.vmem %s4, 192
    %v1784 = vld [vmem:[%s1783] sm:$0xf]
    %v1785 = vld [vmem:[%s1783 + $0x4] sm:$0xf]
    %v1786 = vld [vmem:[%s1783 + $0x8] sm:$0xf]
    %v1787 = vld [vmem:[%s1783 + $0xc] sm:$0xf]
    %v1788 = vld [vmem:[%s1783 + $0x10] sm:$0xf]
    %v1789 = vld [vmem:[%s1783 + $0x14] sm:$0xf]
    %v1790 = vld [vmem:[%s1783 + $0x18] sm:$0xf]
    %v1791 = vld [vmem:[%s1783 + $0x1c] sm:$0xf]
    %v1792 = vld [vmem:[%s1783 + $0x20] sm:$0xf]
    %v1793 = vld [vmem:[%s1783 + $0x24] sm:$0xf]
    %v1794 = vld [vmem:[%s1783 + $0x28] sm:$0xf]
    %v1795 = vld [vmem:[%s1783 + $0x2c] sm:$0xf]
    %v1796 = vld [vmem:[%s1783 + $0x30] sm:$0xf]
    %v1797 = vld [vmem:[%s1783 + $0x34] sm:$0xf]
    %v1798 = vld [vmem:[%s1783 + $0x38] sm:$0xf]
    %v1799 = vld [vmem:[%s1783 + $0x3c] sm:$0xf]
    %v1816 = vunpack.c.l.b16 %v1784
    %v1817 = vunpack.c.l.b16 %v1785
    %v1818 = vunpack.c.l.b16 %v1786
    %v1819 = vunpack.c.l.b16 %v1787
    %v1820 = vunpack.c.l.b16 %v1788
    %v1821 = vunpack.c.l.b16 %v1789
    %v1822 = vunpack.c.l.b16 %v1790
    %v1823 = vunpack.c.l.b16 %v1791
    %v1824 = vunpack.c.l.b16 %v1792
    %v1825 = vunpack.c.l.b16 %v1793
    %v1826 = vunpack.c.l.b16 %v1794
    %v1827 = vunpack.c.l.b16 %v1795
    %v1828 = vunpack.c.l.b16 %v1796
    %v1829 = vunpack.c.l.b16 %v1797
    %v1830 = vunpack.c.l.b16 %v1798
    %v1831 = vunpack.c.l.b16 %v1799
    %v1832 = vpack.c.b16 %v1817, %v1816
    %v1833 = vpack.c.b16 %v1819, %v1818
    %v1834 = vpack.c.b16 %v1821, %v1820
    %v1835 = vpack.c.b16 %v1823, %v1822
    %v1836 = vpack.c.b16 %v1825, %v1824
    %v1837 = vpack.c.b16 %v1827, %v1826
    %v1838 = vpack.c.b16 %v1829, %v1828
    %v1839 = vpack.c.b16 %v1831, %v1830
    %1848 = vmatpush.bf16.msra.mxu0 %v1839
    %1849 = vmatpush.bf16.msra.mxu0 %v1838
    %1850 = vmatpush.bf16.msra.mxu0 %v1837
    %1851 = vmatpush.bf16.msra.mxu0 %v1836
    %1852 = vmatpush.bf16.msra.mxu0 %v1835
    %1853 = vmatpush.bf16.msra.mxu0 %v1834
    %1854 = vmatpush.bf16.msra.mxu0 %v1833
    %1855 = vmatpush.bf16.msra.mxu0 %v1832
    %1856 = vmatmul.bf16.gmra.mxu0 %v204
    %v1857 = vpop.f32.mrf.mxu0
    %v1858 = vadd.f32 0.0, %v1857
    %v1859 = vpop.f32.mrf.mxu0
    %v1860 = vadd.f32 0.0, %v1859
    %1861 = vdwg.mxu0
    %v1862 = vpack.c.bf16 %v1860, %v1858
    %s1863 = scalar_lea.vmem %s5, 384
    %v1864 = vld [vmem:[%s1863] sm:$0xff]
    %v1865 = vld [vmem:[%s1863 + $0x8] sm:$0xff]
    %v1866 = vld [vmem:[%s1863 + $0x10] sm:$0xff]
    %v1867 = vld [vmem:[%s1863 + $0x18] sm:$0xff]
    %v1868 = vld [vmem:[%s1863 + $0x20] sm:$0xff]
    %v1869 = vld [vmem:[%s1863 + $0x28] sm:$0xff]
    %v1870 = vld [vmem:[%s1863 + $0x30] sm:$0xff]
    %v1871 = vld [vmem:[%s1863 + $0x38] sm:$0xff]
    %v1872 = vld [vmem:[%s1863 + $0x40] sm:$0xff]
    %v1873 = vld [vmem:[%s1863 + $0x48] sm:$0xff]
    %v1874 = vld [vmem:[%s1863 + $0x50] sm:$0xff]
    %v1875 = vld [vmem:[%s1863 + $0x58] sm:$0xff]
    %v1876 = vld [vmem:[%s1863 + $0x60] sm:$0xff]
    %v1877 = vld [vmem:[%s1863 + $0x68] sm:$0xff]
    %v1878 = vld [vmem:[%s1863 + $0x70] sm:$0xff]
    %v1879 = vld [vmem:[%s1863 + $0x78] sm:$0xff]
    %v1896 = vunpack.c.l.b16 %v1864
    %v1897 = vunpack.c.h.b16 %v1864
    %v1898 = vunpack.c.l.b16 %v1865
    %v1899 = vunpack.c.h.b16 %v1865
    %v1900 = vunpack.c.l.b16 %v1866
    %v1901 = vunpack.c.h.b16 %v1866
    %v1902 = vunpack.c.l.b16 %v1867
    %v1903 = vunpack.c.h.b16 %v1867
    %v1904 = vunpack.c.l.b16 %v1868
    %v1905 = vunpack.c.h.b16 %v1868
    %v1906 = vunpack.c.l.b16 %v1869
    %v1907 = vunpack.c.h.b16 %v1869
    %v1908 = vunpack.c.l.b16 %v1870
    %v1909 = vunpack.c.h.b16 %v1870
    %v1910 = vunpack.c.l.b16 %v1871
    %v1911 = vunpack.c.h.b16 %v1871
    %v1912 = vunpack.c.l.b16 %v1872
    %v1913 = vunpack.c.h.b16 %v1872
    %v1914 = vunpack.c.l.b16 %v1873
    %v1915 = vunpack.c.h.b16 %v1873
    %v1916 = vunpack.c.l.b16 %v1874
    %v1917 = vunpack.c.h.b16 %v1874
    %v1918 = vunpack.c.l.b16 %v1875
    %v1919 = vunpack.c.h.b16 %v1875
    %v1920 = vunpack.c.l.b16 %v1876
    %v1921 = vunpack.c.h.b16 %v1876
    %v1922 = vunpack.c.l.b16 %v1877
    %v1923 = vunpack.c.h.b16 %v1877
    %v1924 = vunpack.c.l.b16 %v1878
    %v1925 = vunpack.c.h.b16 %v1878
    %v1926 = vunpack.c.l.b16 %v1879
    %v1927 = vunpack.c.h.b16 %v1879
    %v1928 = vpack.c.b16 %v1900, %v1896
    %v1929 = vpack.c.b16 %v1901, %v1897
    %v1930 = vpack.c.b16 %v1902, %v1898
    %v1931 = vpack.c.b16 %v1903, %v1899
    %v1932 = vpack.c.b16 %v1908, %v1904
    %v1933 = vpack.c.b16 %v1909, %v1905
    %v1934 = vpack.c.b16 %v1910, %v1906
    %v1935 = vpack.c.b16 %v1911, %v1907
    %v1936 = vpack.c.b16 %v1916, %v1912
    %v1937 = vpack.c.b16 %v1917, %v1913
    %v1938 = vpack.c.b16 %v1918, %v1914
    %v1939 = vpack.c.b16 %v1919, %v1915
    %v1940 = vpack.c.b16 %v1924, %v1920
    %v1941 = vpack.c.b16 %v1925, %v1921
    %v1942 = vpack.c.b16 %v1926, %v1922
    %v1943 = vpack.c.b16 %v1927, %v1923
    %v1961 = vsel %vm708, %v1862, 0
    %1963 = vmatpush.bf16.msra.mxu0 0
    %1964 = vmatpush.bf16.msra.mxu0 0
    %1965 = vmatpush.bf16.msra.mxu0 0
    %1966 = vmatpush.bf16.msra.mxu0 0
    %1967 = vmatpush.bf16.msra.mxu0 %v1940
    %1968 = vmatpush.bf16.msra.mxu0 %v1936
    %1969 = vmatpush.bf16.msra.mxu0 %v1932
    %1970 = vmatpush.bf16.msra.mxu0 %v1928
    %1971 = vmatmul.bf16.gmra.mxu0 %v1961
    %v1972 = vpop.f32.mrf.mxu0
    %v1973 = vadd.f32 0.0, %v1972
    %v1974 = vpop.f32.mrf.mxu0
    %v1975 = vadd.f32 0.0, %v1974
    %1976 = vdwg.mxu0
    %1977 = vmatpush.bf16.msra.mxu0 0
    %1978 = vmatpush.bf16.msra.mxu0 0
    %1979 = vmatpush.bf16.msra.mxu0 0
    %1980 = vmatpush.bf16.msra.mxu0 0
    %1981 = vmatpush.bf16.msra.mxu0 %v1941
    %1982 = vmatpush.bf16.msra.mxu0 %v1937
    %1983 = vmatpush.bf16.msra.mxu0 %v1933
    %1984 = vmatpush.bf16.msra.mxu0 %v1929
    %1985 = vmatmul.bf16.gmra.mxu0 %v1961
    %v1986 = vpop.f32.mrf.mxu0
    %v1987 = vadd.f32 0.0, %v1986
    %v1988 = vpop.f32.mrf.mxu0
    %v1989 = vadd.f32 0.0, %v1988
    %1990 = vdwg.mxu0
    %1991 = vmatpush.bf16.msra.mxu0 0
    %1992 = vmatpush.bf16.msra.mxu0 0
    %1993 = vmatpush.bf16.msra.mxu0 0
    %1994 = vmatpush.bf16.msra.mxu0 0
    %1995 = vmatpush.bf16.msra.mxu0 %v1942
    %1996 = vmatpush.bf16.msra.mxu0 %v1938
    %1997 = vmatpush.bf16.msra.mxu0 %v1934
    %1998 = vmatpush.bf16.msra.mxu0 %v1930
    %1999 = vmatmul.bf16.gmra.mxu0 %v1961
    %v2000 = vpop.f32.mrf.mxu0
    %v2001 = vadd.f32 0.0, %v2000
    %v2002 = vpop.f32.mrf.mxu0
    %v2003 = vadd.f32 0.0, %v2002
    %2004 = vdwg.mxu0
    %2005 = vmatpush.bf16.msra.mxu0 0
    %2006 = vmatpush.bf16.msra.mxu0 0
    %2007 = vmatpush.bf16.msra.mxu0 0
    %2008 = vmatpush.bf16.msra.mxu0 0
    %2009 = vmatpush.bf16.msra.mxu0 %v1943
    %2010 = vmatpush.bf16.msra.mxu0 %v1939
    %2011 = vmatpush.bf16.msra.mxu0 %v1935
    %2012 = vmatpush.bf16.msra.mxu0 %v1931
    %2013 = vmatmul.bf16.gmra.mxu0 %v1961
    %v2014 = vpop.f32.mrf.mxu0
    %v2015 = vadd.f32 0.0, %v2014
    %v2016 = vpop.f32.mrf.mxu0
    %v2017 = vadd.f32 0.0, %v2016
    %2018 = vdwg.mxu0
    %v2019 = vadd.f32 %v487, %v1973
    %v2020 = vadd.f32 %v501, %v1987
    %v2021 = vadd.f32 %v515, %v2001
    %v2022 = vadd.f32 %v529, %v2015
    %v2023 = vadd.f32 %v489, %v1975
    %v2024 = vadd.f32 %v503, %v1989
    %v2025 = vadd.f32 %v517, %v2003
    %v2026 = vadd.f32 %v531, %v2017
    %v2027 = vxor.u32 %v2019, 2147483648
    %v2028 = vxor.u32 %v2020, 2147483648
    %v2029 = vxor.u32 %v2023, 2147483648
    %v2030 = vxor.u32 %v2024, 2147483648
    %v2031 = vmul.f32 %v2027, 1.442695
    %v2032 = vpow.pop %v2031
    %v2033 = vmul.f32 %v2028, 1.442695
    %v2034 = vpow.pop %v2033
    %v2035 = vmul.f32 %v2029, 1.442695
    %v2036 = vpow.pop %v2035
    %v2037 = vmul.f32 %v2030, 1.442695
    %v2038 = vpow.pop %v2037
    %v2039 = vadd.f32 %v2032, 1.0
    %v2040 = vadd.f32 %v2034, 1.0
    %v2041 = vadd.f32 %v2036, 1.0
    %v2042 = vadd.f32 %v2038, 1.0
    %v2043 = vrcp.pop %v2039
    %v2044 = vmul.f32 %v2039, %v2043
    %v2045 = vsub.f32 1.0, %v2044
    %v2046 = vmul.f32 %v2043, %v2045
    %v2047 = vadd.f32 %v2043, %v2046
    %vm2048 = vweird.f32 %v2039
    %vm2049 = vweird.f32 %v2043
    %vm2050 = vmor %vm2048, %vm2049
    %v2051 = vsel %vm2050, %v2043, %v2047
    %v2052 = vand.u32 2147483647, %v2039
    %vm2053 = vcmp.eq.f32.partialorder %v2052, 8.507059e+37
    %v2054 = vand.u32 %v2039, 2147483648
    %v2055 = vor.u32 1.1754944e-38, %v2054
    %v2056 = vsel %vm2053, %v2055, %v2051
    %v2057 = vmul.f32 1.0, %v2056
    %v2058 = vrcp.pop %v2040
    %v2059 = vmul.f32 %v2040, %v2058
    %v2060 = vsub.f32 1.0, %v2059
    %v2061 = vmul.f32 %v2058, %v2060
    %v2062 = vadd.f32 %v2058, %v2061
    %vm2063 = vweird.f32 %v2040
    %vm2064 = vweird.f32 %v2058
    %vm2065 = vmor %vm2063, %vm2064
    %v2066 = vsel %vm2065, %v2058, %v2062
    %v2067 = vand.u32 2147483647, %v2040
    %vm2068 = vcmp.eq.f32.partialorder %v2067, 8.507059e+37
    %v2069 = vand.u32 %v2040, 2147483648
    %v2070 = vor.u32 1.1754944e-38, %v2069
    %v2071 = vsel %vm2068, %v2070, %v2066
    %v2072 = vmul.f32 1.0, %v2071
    %v2073 = vrcp.pop %v2041
    %v2074 = vmul.f32 %v2041, %v2073
    %v2075 = vsub.f32 1.0, %v2074
    %v2076 = vmul.f32 %v2073, %v2075
    %v2077 = vadd.f32 %v2073, %v2076
    %vm2078 = vweird.f32 %v2041
    %vm2079 = vweird.f32 %v2073
    %vm2080 = vmor %vm2078, %vm2079
    %v2081 = vsel %vm2080, %v2073, %v2077
    %v2082 = vand.u32 2147483647, %v2041
    %vm2083 = vcmp.eq.f32.partialorder %v2082, 8.507059e+37
    %v2084 = vand.u32 %v2041, 2147483648
    %v2085 = vor.u32 1.1754944e-38, %v2084
    %v2086 = vsel %vm2083, %v2085, %v2081
    %v2087 = vmul.f32 1.0, %v2086
    %v2088 = vrcp.pop %v2042
    %v2089 = vmul.f32 %v2042, %v2088
    %v2090 = vsub.f32 1.0, %v2089
    %v2091 = vmul.f32 %v2088, %v2090
    %v2092 = vadd.f32 %v2088, %v2091
    %vm2093 = vweird.f32 %v2042
    %vm2094 = vweird.f32 %v2088
    %vm2095 = vmor %vm2093, %vm2094
    %v2096 = vsel %vm2095, %v2088, %v2092
    %v2097 = vand.u32 2147483647, %v2042
    %vm2098 = vcmp.eq.f32.partialorder %v2097, 8.507059e+37
    %v2099 = vand.u32 %v2042, 2147483648
    %v2100 = vor.u32 1.1754944e-38, %v2099
    %v2101 = vsel %vm2098, %v2100, %v2096
    %v2102 = vmul.f32 1.0, %v2101
    %v2103 = vmul.f32 %v2019, %v2057
    %v2104 = vmul.f32 %v2020, %v2072
    %v2105 = vmul.f32 %v2023, %v2087
    %v2106 = vmul.f32 %v2024, %v2102
    %v2107 = vmul.f32 %v2103, %v2021
    %v2108 = vmul.f32 %v2104, %v2022
    %v2109 = vmul.f32 %v2105, %v2025
    %v2110 = vmul.f32 %v2106, %v2026
    %vm2111 = vcmp.eq.f32.partialorder %v170, 3.0
    %vm2112 = vcmp.eq.f32.partialorder %v173, 3.0
    %v2113 = vsel %vm2111, 1.0, 0.0
    %v2114 = vsel %vm2112, 1.0, 0.0
    %vm2115 = vcmp.eq.f32.partialorder %v196, 3.0
    %vm2116 = vcmp.eq.f32.partialorder %v199, 3.0
    %v2117 = vsel %vm2115, %v186, 0.0
    %v2118 = vsel %vm2116, %v189, 0.0
    %v2119 = vadd.f32 %v2113, %v2117
    %v2120 = vadd.f32 %v2114, %v2118
    %v2121 = vmul.f32 %v2119, %v202
    %v2122 = vmul.f32 %v2120, %v203
    %v2123 = vmul.f32 %v2107, %v2121
    %v2124 = vmul.f32 %v2108, %v2121
    %v2125 = vmul.f32 %v2109, %v2122
    %v2126 = vmul.f32 %v2110, %v2122
    %v2127 = vadd.f32 %v1742, %v2123
    %v2128 = vadd.f32 %v1743, %v2124
    %v2129 = vadd.f32 %v1744, %v2125
    %v2130 = vadd.f32 %v1745, %v2126
    %v2131 = vpack.c.bf16 %v2125, %v2123
    %v2132 = vpack.c.bf16 %v2126, %v2124
    %2133 = vmatpush.bf16.msra.mxu0 %v953
    %2134 = vmatpush.bf16.msra.mxu0 %v952
    %2135 = vmatpush.bf16.msra.mxu0 %v951
    %2136 = vmatpush.bf16.msra.mxu0 %v950
    %2137 = vmatpush.bf16.msra.mxu0 %v949
    %2138 = vmatpush.bf16.msra.mxu0 %v948
    %2139 = vmatpush.bf16.msra.mxu0 %v947
    %2140 = vmatpush.bf16.msra.mxu0 %v946
    %2141 = vmatmul.bf16.gmra.mxu0 %v2131
    %v2142 = vpop.f32.mrf.mxu0
    %v2143 = vadd.f32 0.0, %v2142
    %v2144 = vpop.f32.mrf.mxu0
    %v2145 = vadd.f32 0.0, %v2144
    %2146 = vdwg.mxu0
    %2147 = vmatpush.bf16.msra.mxu0 %v961
    %2148 = vmatpush.bf16.msra.mxu0 %v960
    %2149 = vmatpush.bf16.msra.mxu0 %v959
    %2150 = vmatpush.bf16.msra.mxu0 %v958
    %2151 = vmatpush.bf16.msra.mxu0 %v957
    %2152 = vmatpush.bf16.msra.mxu0 %v956
    %2153 = vmatpush.bf16.msra.mxu0 %v955
    %2154 = vmatpush.bf16.msra.mxu0 %v954
    %2155 = vmatmul.bf16.gmra.mxu0 %v2132
    %v2156 = vpop.f32.mrf.mxu0
    %v2157 = vadd.f32 %v2143, %v2156
    %v2158 = vpop.f32.mrf.mxu0
    %v2159 = vadd.f32 %v2145, %v2158
    %2160 = vdwg.mxu0
    %vm2161 = vcmp.ge.s32.totalorder %v156, 96
    %vm2162 = vcmp.lt.s32.totalorder %v156, 128
    %vm2163 = vmand %vm2161, %vm2162
    %v2164 = vsel %vm2163, %v2157, 0.0
    %v2165 = vsel %vm2163, %v2159, 0.0
    %v2166 = vadd.f32 %v1781, %v2164
    %v2167 = vadd.f32 %v1782, %v2165
    %v2168 = vpack.c.bf16 %v2129, %v2127
    %v2169 = vpack.c.bf16 %v2130, %v2128
    %v2170 = vpack.c.bf16 %v2167, %v2166
    %v2187 = vunpack.c.l.b16 %v301
    %v2188 = vunpack.c.l.b16 %v302
    %v2189 = vunpack.c.l.b16 %v303
    %v2190 = vunpack.c.l.b16 %v304
    %v2191 = vunpack.c.l.b16 %v305
    %v2192 = vunpack.c.l.b16 %v306
    %v2193 = vunpack.c.l.b16 %v307
    %v2194 = vunpack.c.l.b16 %v308
    %v2195 = vunpack.c.l.b16 %v309
    %v2196 = vunpack.c.l.b16 %v310
    %v2197 = vunpack.c.l.b16 %v311
    %v2198 = vunpack.c.l.b16 %v312
    %v2199 = vunpack.c.l.b16 %v313
    %v2200 = vunpack.c.l.b16 %v314
    %v2201 = vunpack.c.l.b16 %v315
    %v2202 = vunpack.c.l.b16 %v316
    %v2203 = vpack.c.b16 %v2188, %v2187
    %v2204 = vpack.c.b16 %v2190, %v2189
    %v2205 = vpack.c.b16 %v2192, %v2191
    %v2206 = vpack.c.b16 %v2194, %v2193
    %v2207 = vpack.c.b16 %v2196, %v2195
    %v2208 = vpack.c.b16 %v2198, %v2197
    %v2209 = vpack.c.b16 %v2200, %v2199
    %v2210 = vpack.c.b16 %v2202, %v2201
    %2219 = vmatpush.bf16.msra.mxu0 %v2210
    %2220 = vmatpush.bf16.msra.mxu0 %v2209
    %2221 = vmatpush.bf16.msra.mxu0 %v2208
    %2222 = vmatpush.bf16.msra.mxu0 %v2207
    %2223 = vmatpush.bf16.msra.mxu0 %v2206
    %2224 = vmatpush.bf16.msra.mxu0 %v2205
    %2225 = vmatpush.bf16.msra.mxu0 %v2204
    %2226 = vmatpush.bf16.msra.mxu0 %v2203
    %2227 = vmatmul.bf16.gmra.mxu0 %v2170
    %v2228 = vpop.f32.mrf.mxu0
    %v2229 = vadd.f32 0.0, %v2228
    %v2230 = vpop.f32.mrf.mxu0
    %v2231 = vadd.f32 0.0, %v2230
    %2232 = vdwg.mxu0
    %v2265 = vunpack.c.l.b16 %v237
    %v2266 = vunpack.c.l.b16 %v238
    %v2267 = vunpack.c.l.b16 %v239
    %v2268 = vunpack.c.l.b16 %v240
    %v2269 = vunpack.c.l.b16 %v241
    %v2270 = vunpack.c.l.b16 %v242
    %v2271 = vunpack.c.l.b16 %v243
    %v2272 = vunpack.c.l.b16 %v244
    %v2273 = vunpack.c.l.b16 %v245
    %v2274 = vunpack.c.l.b16 %v246
    %v2275 = vunpack.c.l.b16 %v247
    %v2276 = vunpack.c.l.b16 %v248
    %v2277 = vunpack.c.l.b16 %v249
    %v2278 = vunpack.c.l.b16 %v250
    %v2279 = vunpack.c.l.b16 %v251
    %v2280 = vunpack.c.l.b16 %v252
    %v2281 = vunpack.c.l.b16 %v253
    %v2282 = vunpack.c.l.b16 %v254
    %v2283 = vunpack.c.l.b16 %v255
    %v2284 = vunpack.c.l.b16 %v256
    %v2285 = vunpack.c.l.b16 %v257
    %v2286 = vunpack.c.l.b16 %v258
    %v2287 = vunpack.c.l.b16 %v259
    %v2288 = vunpack.c.l.b16 %v260
    %v2289 = vunpack.c.l.b16 %v261
    %v2290 = vunpack.c.l.b16 %v262
    %v2291 = vunpack.c.l.b16 %v263
    %v2292 = vunpack.c.l.b16 %v264
    %v2293 = vunpack.c.l.b16 %v265
    %v2294 = vunpack.c.l.b16 %v266
    %v2295 = vunpack.c.l.b16 %v267
    %v2296 = vunpack.c.l.b16 %v268
    %v2297 = vpack.c.b16 %v2266, %v2265
    %v2298 = vpack.c.b16 %v2268, %v2267
    %v2299 = vpack.c.b16 %v2270, %v2269
    %v2300 = vpack.c.b16 %v2272, %v2271
    %v2301 = vpack.c.b16 %v2274, %v2273
    %v2302 = vpack.c.b16 %v2276, %v2275
    %v2303 = vpack.c.b16 %v2278, %v2277
    %v2304 = vpack.c.b16 %v2280, %v2279
    %v2305 = vpack.c.b16 %v2282, %v2281
    %v2306 = vpack.c.b16 %v2284, %v2283
    %v2307 = vpack.c.b16 %v2286, %v2285
    %v2308 = vpack.c.b16 %v2288, %v2287
    %v2309 = vpack.c.b16 %v2290, %v2289
    %v2310 = vpack.c.b16 %v2292, %v2291
    %v2311 = vpack.c.b16 %v2294, %v2293
    %v2312 = vpack.c.b16 %v2296, %v2295
    %2329 = vmatpush.bf16.msra.mxu0 %v2304
    %2330 = vmatpush.bf16.msra.mxu0 %v2303
    %2331 = vmatpush.bf16.msra.mxu0 %v2302
    %2332 = vmatpush.bf16.msra.mxu0 %v2301
    %2333 = vmatpush.bf16.msra.mxu0 %v2300
    %2334 = vmatpush.bf16.msra.mxu0 %v2299
    %2335 = vmatpush.bf16.msra.mxu0 %v2298
    %2336 = vmatpush.bf16.msra.mxu0 %v2297
    %2337 = vmatmul.bf16.gmra.mxu0 %v2168
    %v2338 = vpop.f32.mrf.mxu0
    %v2339 = vadd.f32 %v2229, %v2338
    %v2340 = vpop.f32.mrf.mxu0
    %v2341 = vadd.f32 %v2231, %v2340
    %2342 = vdwg.mxu0
    %2343 = vmatpush.bf16.msra.mxu0 %v2312
    %2344 = vmatpush.bf16.msra.mxu0 %v2311
    %2345 = vmatpush.bf16.msra.mxu0 %v2310
    %2346 = vmatpush.bf16.msra.mxu0 %v2309
    %2347 = vmatpush.bf16.msra.mxu0 %v2308
    %2348 = vmatpush.bf16.msra.mxu0 %v2307
    %2349 = vmatpush.bf16.msra.mxu0 %v2306
    %2350 = vmatpush.bf16.msra.mxu0 %v2305
    %2351 = vmatmul.bf16.gmra.mxu0 %v2169
    %v2352 = vpop.f32.mrf.mxu0
    %v2353 = vadd.f32 %v2339, %v2352
    %v2354 = vpop.f32.mrf.mxu0
    %v2355 = vadd.f32 %v2341, %v2354
    %2356 = vdwg.mxu0
    %2357 = vst [vmem:[#allocation11] sm:$0xff] %v2353
    %2358 = vst [vmem:[#allocation11 + $0x8] sm:$0xff] %v2355
    // Predicated region
    $region54: #{tpu_custom_call.1} parent=1 // pred_check
      _
    $region55: #{tpu_custom_call.1} parent=1 // pred_check_branch
      %2360 = sbr.rel (0) target = $region57
    $region56: #{tpu_custom_call.1} parent=1 // pred_region
      %2362 = vsyncadd [#allocation4], 0
      %s2363 = sshll.u32 [#allocation11], 4
      %s2364 = int_to_ptr.vmem [resolvable:$true] %s2363
      %s2365 = sshll.u32 %s8, 4
      %s2366 = int_to_ptr.hbm [resolvable:$true] %s2365
      %2371 = dma.vmem_to_hbm [thread:$0]  %s2364, 256, %s2366, [#allocation4], 128, 128, 8
    $region57: #{tpu_custom_call.1} parent=1 // pred_fallthru
      _
    // Predicated region
    $region58: #{tpu_custom_call.1} parent=1 // pred_check
      _
    $region59: #{tpu_custom_call.1} parent=1 // pred_check_branch
      %2373 = sbr.rel (0) target = $region61
    $region60: #{tpu_custom_call.1} parent=1 // pred_region
      _
    $region61: #{tpu_custom_call.1} parent=1 // pred_fallthru
      _
    // Predicated region
    $region62: #{tpu_custom_call.1} parent=1 // pred_check
      _
    $region63: #{tpu_custom_call.1} parent=1 // pred_check_branch
      %2375 = sbr.rel (0) target = $region65
    $region64: #{tpu_custom_call.1} parent=1 // pred_region
      %2377 = dma.done [#allocation4], 256
    $region65: #{tpu_custom_call.1} parent=1 // pred_fallthru
      _
    // Predicated region
    $region66: #{tpu_custom_call.1} parent=1 // pred_check
      _
    $region67: #{tpu_custom_call.1} parent=1 // pred_check_branch
      %2379 = sbr.rel (0) target = $region69
    $region68: #{tpu_custom_call.1} parent=1 // pred_region
      _
    $region69: #{tpu_custom_call.1} parent=1 // pred_fallthru
      _
    %2380 = vsyncpa [#allocation3], 1
    %2381 = vsyncpa [#allocation6], 1
    %2382 = vsyncpa [#allocation9], 1
    %2383 = vsyncpa [#allocation4], 1

</llo_original>
